<compile_context>
chip_gen: v6e
topology: v6e:2x2x1
jax: 0.10.0
libtpu: 0.0.40
codegen_flags: <defaults>
</compile_context>

<pallas_src>
import math

import numpy as np
import jax
import jax.numpy as jnp
from jax import lax
from jax.experimental import pallas as pl
from jax.experimental.pallas import tpu as pltpu

# --- problem sizes (small, consistent with the module) ---
S, N, E = 8, 2, 4          # seq_len, batch, feature_size (d_model)
H, HD = 2, E // 2          # nhead=2, head_dim=2
F = 2048                   # nn.TransformerEncoderLayer default dim_feedforward
LN_EPS = 1e-5
NEG_INF = -1e30            # large finite; diagonal always unmasked -> same as -inf


def _layernorm(x, gamma, beta):
    mu = jnp.mean(x, axis=-1, keepdims=True)
    xc = x - mu
    var = jnp.mean(xc * xc, axis=-1, keepdims=True)
    return xc * lax.rsqrt(var + LN_EPS) * gamma + beta


# ----------------------------------------------------------------------------
# Pallas kernel: full encoder-layer + decoder, both batch elements fused.
#   src_ref : (S, N*E) f32    -- row-major reshape of the (S, N, E) input
#   sp_ref  : (32, 16) f32    -- packed small params + causal mask (see init_params)
#   ffn_ref : (9, F)  bf16    -- rows 0:4 = W1^T (E,F), 4:8 = W2 (E,F), 8 = b1
#   out_ref : (N*S, 1) f32    -- batch-0 rows then batch-1 rows
# ----------------------------------------------------------------------------
def transam_kernel(src_ref, sp_ref, ffn_ref, out_ref):
    wqkv = sp_ref[0:4, 0:3 * E]          # (E, 3E)  [q|k|v]; q cols pre-scaled
    wo = sp_ref[4:8, 0:E]                # (E, E)   = out_proj.weight.T
    bqkv = sp_ref[8:9, 0:3 * E]          # (1, 3E)  q part pre-scaled
    bo = sp_ref[9:10, 0:E]
    g1 = sp_ref[10:11, 0:E]
    be1 = sp_ref[11:12, 0:E]
    g2 = sp_ref[12:13, 0:E]
    be2 = sp_ref[13:14, 0:E]
    b2 = sp_ref[14:15, 0:E]
    wd = sp_ref[15:16, 0:E]              # decoder weight row
    bd = sp_ref[16:17, 0:1]              # decoder bias
    pe0 = sp_ref[17:18, 0:E]             # pe[0] (constant over seq, batch 0)
    pe1 = sp_ref[18:19, 0:E]             # pe[1]
    mask = sp_ref[24:32, 0:S]            # (S, S) precomputed causal mask

    # Fold (S,N,E) -> (N*S,E) reordering + positional-encoding add into the
    # kernel: batch-0 rows then batch-1 rows, one (N*S, E) activation slab.
    x = jnp.concatenate([src_ref[:, 0:E] + pe0,
                         src_ref[:, E:2 * E] + pe1], axis=0)          # (NS, E)

    # ---------------- fused QKV projection (all batches & heads) -------------
    qkv = jnp.dot(x, wqkv, preferred_element_type=jnp.float32) + bqkv  # (NS,3E)

    # One transpose of the packed K|V half: rows = head-dim channels
    # (k: rows 0:E, v: rows E:2E), columns = the N*S token rows.
    kvT = jnp.transpose(qkv[:, E:3 * E])                               # (2E, NS)

    # ---------------- attention on VPU/XLU: static (n, h) loop ---------------
    outs = []
    for n in range(N):
        r0 = n * S
        heads = []
        for h in range(H):
            c = h * HD
            q0 = qkv[r0:r0 + S, c:c + 1]                   # (S, 1)
            q1 = qkv[r0:r0 + S, c + 1:c + 2]
            k0 = kvT[c:c + 1, r0:r0 + S]                   # (1, S)
            k1 = kvT[c + 1:c + 2, r0:r0 + S]
            v0 = kvT[E + c:E + c + 1, r0:r0 + S]           # (1, S)
            v1 = kvT[E + c + 1:E + c + 2, r0:r0 + S]

            # scores as two outer-product mul-adds (scale folded into Wq/bq)
            s = q0 * k0 + q1 * k1 + mask                   # (S, S)
            m = jnp.max(s, axis=-1, keepdims=True)
            p = jnp.exp(s - m)
            p = p * pl.reciprocal(jnp.sum(p, axis=-1, keepdims=True),
                                  approx=True)
            # P @ V as two lane reductions
            o0 = jnp.sum(p * v0, axis=-1, keepdims=True)   # (S, 1)
            o1 = jnp.sum(p * v1, axis=-1, keepdims=True)
            heads.append(jnp.concatenate([o0, o1], axis=1))            # (S, HD)
        outs.append(jnp.concatenate(heads, axis=1))                    # (S, E)
    o_all = jnp.concatenate(outs, axis=0)                              # (NS, E)

    # single output projection for all heads/batches, bias added once
    attn = jnp.dot(o_all, wo, preferred_element_type=jnp.float32) + bo

    # residual + LayerNorm1 (post-norm layer)
    x = _layernorm(x + attn, g1, be1)

    # ---------------- feed-forward (ReLU), one (NS, F) pass -------------------
    w1 = ffn_ref[0:4, :]                                   # (E, F) bf16
    b1 = ffn_ref[8:9, :].astype(jnp.float32)               # (1, F)
    h1 = jnp.maximum(
        jnp.dot(x.astype(jnp.bfloat16), w1,
                preferred_element_type=jnp.float32) + b1, 0.0)         # (NS, F)

    # down-projection: E=4 broadcast-multiply + lane reductions (no transposed
    # MXU operand, no hidden XLU transpose / padded scratch)
    w2f = ffn_ref[4:8, :].astype(jnp.float32)              # (E, F)
    h2 = jnp.concatenate(
        [jnp.sum(h1 * w2f[e:e + 1, :], axis=-1, keepdims=True)
         for e in range(E)], axis=1) + b2                              # (NS, E)

    # residual + LayerNorm2
    x = _layernorm(x + h2, g2, be2)

    # ---------------- decoder Linear(E -> 1) ----------------------------------
    out_ref[...] = jnp.sum(x * wd, axis=-1, keepdims=True) + bd        # (NS, 1)


def transam_forward(src_sne, kp):
    """src_sne: (S, N, E) float32 in PyTorch (seq, batch, feature) layout."""
    s, n, e = src_sne.shape
    src2d = src_sne.reshape(s, n * e)            # free row-major reshape
    y = pl.pallas_call(
        transam_kernel,
        out_shape=jax.ShapeDtypeStruct((n * s, 1), jnp.float32),
        in_specs=[pl.BlockSpec(memory_space=pltpu.MemorySpace.VMEM)] * 3,
        out_specs=pl.BlockSpec(memory_space=pltpu.MemorySpace.VMEM),
        cost_estimate=pl.CostEstimate(flops=531_000, transcendentals=352,
                                      bytes_accessed=39_232),
    )(src2d, kp['small'], kp['ffn'])
    # (N*S, 1) -> (S, N, 1): 16-element reorder, free/fusable in the wrapper
    return y.reshape(n, s, 1).transpose(1, 0, 2)


# ----------------------------------------------------------------------------
# Deterministic parameter construction (shapes from TransAm.__init__)
# ----------------------------------------------------------------------------
def positional_encoding(max_len, d_model):
    position = np.arange(max_len, dtype=np.float32)[:, None]
    div_term = np.exp(np.arange(0, d_model, 2, dtype=np.float32)
                      * (-math.log(10000.0) / d_model))
    pe = np.zeros((max_len, d_model), dtype=np.float32)
    pe[:, 0::2] = np.sin(position * div_term)
    pe[:, 1::2] = np.cos(position * div_term)
    return pe


def init_params(key):
    ks = jax.random.split(key, 9)
    f32 = jnp.float32
    b_attn = 1.0 / math.sqrt(E)
    b_ff1 = 1.0 / math.sqrt(E)
    b_ff2 = 1.0 / math.sqrt(F)
    initrange = 0.1

    in_proj_w = jax.random.uniform(ks[0], (3 * E, E), f32, -b_attn, b_attn)
    in_proj_b = jax.random.uniform(ks[1], (3 * E,), f32, -b_attn, b_attn)
    wo = jax.random.uniform(ks[2], (E, E), f32, -b_attn, b_attn)
    bo = jax.random.uniform(ks[3], (E,), f32, -b_attn, b_attn)
    w1 = jax.random.uniform(ks[4], (F, E), f32, -b_ff1, b_ff1)
    b1 = jax.random.uniform(ks[5], (F,), f32, -b_ff1, b_ff1)
    w2 = jax.random.uniform(ks[6], (E, F), f32, -b_ff2, b_ff2)
    b2 = jax.random.uniform(ks[7], (E,), f32, -b_ff2, b_ff2)
    # decoder: matches TransAm.init_weights (uniform(-0.1, 0.1), zero bias)
    wd = jax.random.uniform(ks[8], (1, E), f32, -initrange, initrange)
    bd = jnp.zeros((1,), f32)

    g1 = jnp.ones((E,), f32); be1 = jnp.zeros((E,), f32)
    g2 = jnp.ones((E,), f32); be2 = jnp.zeros((E,), f32)

    pe = jnp.asarray(positional_encoding(5000, E)[:N])    # pe[:, :x.size(1)]

    raw = dict(wq=in_proj_w[:E], wk=in_proj_w[E:2 * E], wv=in_proj_w[2 * E:],
               bq=in_proj_b[:E], bk=in_proj_b[E:2 * E], bv=in_proj_b[2 * E:],
               wo=wo, bo=bo, w1=w1, b1=b1, w2=w2, b2=b2,
               g1=g1, be1=be1, g2=g2, be2=be2, wd=wd, bd=bd, pe=pe)

    # --- pack all small params into one (8,128)-tile-friendly slab ----------
    # Layout chosen so no logical slice crosses an 8-sublane tile boundary.
    scale = 1.0 / math.sqrt(HD)
    small = np.zeros((32, 16), np.float32)
    small[0:4, 0:3 * E] = np.asarray(in_proj_w).T     # Wqkv^T  (E, 3E)
    small[0:4, 0:E] *= scale                          # fold 1/sqrt(hd) into Wq
    small[4:8, 0:E] = np.asarray(wo).T                # Wo^T    (E, E)
    small[8, 0:3 * E] = np.asarray(in_proj_b)
    small[8, 0:E] *= scale                            # fold scale into q bias
    small[9, 0:E] = np.asarray(bo)
    small[10, 0:E] = np.asarray(g1)
    small[11, 0:E] = np.asarray(be1)
    small[12, 0:E] = np.asarray(g2)
    small[13, 0:E] = np.asarray(be2)
    small[14, 0:E] = np.asarray(b2)
    small[15, 0:E] = np.asarray(wd)[0]
    small[16, 0] = np.asarray(bd)[0]
    small[17:19, 0:E] = np.asarray(pe)
    # precomputed causal mask, aligned to the 24:32 sublane group
    i = np.arange(S)
    small[24:32, 0:S] = np.where(i[None, :] <= i[:, None], 0.0, NEG_INF)

    # --- FFN weights lane-dense, bf16, in one slab ----------------------------
    ffn = np.zeros((9, F), np.float32)
    ffn[0:4, :] = np.asarray(w1).T      # linear1: x @ w1.T -> store (E, F)
    ffn[4:8, :] = np.asarray(w2)        # linear2: contracted over F on the VPU
    ffn[8, :] = np.asarray(b1)

    kp = dict(small=jnp.asarray(small),
              ffn=jnp.asarray(ffn, dtype=jnp.bfloat16))
    return raw, kp


# ----------------------------------------------------------------------------
# Pure-JAX reference (mirrors PyTorch eval-mode forward) for a sanity check
# ----------------------------------------------------------------------------
def ref_forward(src, p):
    s, n, e = src.shape
    hp = lax.Precision.HIGHEST
    x = src + p['pe'][None, :, :]                               # (S, N, E)

    q = jnp.einsum('sne,fe->snf', x, p['wq'], precision=hp) + p['bq']
    k = jnp.einsum('sne,fe->snf', x, p['wk'], precision=hp) + p['bk']
    v = jnp.einsum('sne,fe->snf', x, p['wv'], precision=hp) + p['bv']

    def heads(t):
        return t.reshape(s, n, H, HD).transpose(1, 2, 0, 3)     # (N, H, S, hd)

    qh, kh, vh = heads(q), heads(k), heads(v)
    scores = jnp.einsum('nhqd,nhkd->nhqk', qh * (1.0 / math.sqrt(HD)), kh,
                        precision=hp)
    i = jnp.arange(s)
    mask = jnp.where(i[None, :] <= i[:, None], 0.0, -jnp.inf)
    pa = jax.nn.softmax(scores + mask, axis=-1)
    o = jnp.einsum('nhqk,nhkd->nhqd', pa, vh, precision=hp)
    o = o.transpose(2, 0, 1, 3).reshape(s, n, e)
    attn = jnp.einsum('sne,fe->snf', o, p['wo'], precision=hp) + p['bo']

    def ln(t, g, b):
        mu = t.mean(-1, keepdims=True)
        tc = t - mu
        var = (tc * tc).mean(-1, keepdims=True)
        return tc / jnp.sqrt(var + LN_EPS) * g + b

    x = ln(x + attn, p['g1'], p['be1'])
    h1 = jax.nn.relu(jnp.einsum('sne,fe->snf', x, p['w1'], precision=hp)
                     + p['b1'])
    h2 = jnp.einsum('snf,ef->sne', h1, p['w2'], precision=hp) + p['b2']
    x = ln(x + h2, p['g2'], p['be2'])
    return jnp.einsum('sne,oe->sno', x, p['wd'], precision=hp) + p['bd']


if __name__ == "__main__":
    key = jax.random.PRNGKey(0)
    k_src, k_par = jax.random.split(key)
    src = jax.random.normal(k_src, (S, N, E), jnp.float32)   # PyTorch (S, N, E)

    raw, kp = init_params(k_par)

    out = transam_forward(src, kp)
    out = jax.block_until_ready(out)

    ref = ref_forward(src, raw)
    np.testing.assert_allclose(np.asarray(out), np.asarray(ref),
                               rtol=1e-2, atol=1e-2)
    assert out.shape == (S, N, 1)
    print("KERNEL_OK")
</pallas_src>

<mosaic_0001>
module attributes {stable_mosaic.version = 11 : i64} {
  func.func @transam_kernel(%arg0: memref<8x8xf32, #tpu.memory_space<vmem>>, %arg1: memref<32x16xf32, #tpu.memory_space<vmem>>, %arg2: memref<9x2048xbf16, #tpu.memory_space<vmem>>, %arg3: memref<16x1xf32, #tpu.memory_space<vmem>>) attributes {dimension_semantics = [], scalar_prefetch = 0 : i64, scratch_operands = 0 : i64, tpu.core_type = #tpu.core_type<tc>} {
    %c0 = arith.constant 0 : index
    %c0_0 = arith.constant 0 : index
    %0 = vector.load %arg1[%c0, %c0_0] : memref<32x16xf32, #tpu.memory_space<vmem>>, vector<4x12xf32>
    %c4 = arith.constant 4 : index
    %c0_1 = arith.constant 0 : index
    %1 = vector.load %arg1[%c4, %c0_1] : memref<32x16xf32, #tpu.memory_space<vmem>>, vector<4x4xf32>
    %c8 = arith.constant 8 : index
    %c0_2 = arith.constant 0 : index
    %2 = vector.load %arg1[%c8, %c0_2] : memref<32x16xf32, #tpu.memory_space<vmem>>, vector<1x12xf32>
    %c9 = arith.constant 9 : index
    %c0_3 = arith.constant 0 : index
    %3 = vector.load %arg1[%c9, %c0_3] : memref<32x16xf32, #tpu.memory_space<vmem>>, vector<1x4xf32>
    %c10 = arith.constant 10 : index
    %c0_4 = arith.constant 0 : index
    %4 = vector.load %arg1[%c10, %c0_4] : memref<32x16xf32, #tpu.memory_space<vmem>>, vector<1x4xf32>
    %c11 = arith.constant 11 : index
    %c0_5 = arith.constant 0 : index
    %5 = vector.load %arg1[%c11, %c0_5] : memref<32x16xf32, #tpu.memory_space<vmem>>, vector<1x4xf32>
    %c12 = arith.constant 12 : index
    %c0_6 = arith.constant 0 : index
    %6 = vector.load %arg1[%c12, %c0_6] : memref<32x16xf32, #tpu.memory_space<vmem>>, vector<1x4xf32>
    %c13 = arith.constant 13 : index
    %c0_7 = arith.constant 0 : index
    %7 = vector.load %arg1[%c13, %c0_7] : memref<32x16xf32, #tpu.memory_space<vmem>>, vector<1x4xf32>
    %c14 = arith.constant 14 : index
    %c0_8 = arith.constant 0 : index
    %8 = vector.load %arg1[%c14, %c0_8] : memref<32x16xf32, #tpu.memory_space<vmem>>, vector<1x4xf32>
    %c15 = arith.constant 15 : index
    %c0_9 = arith.constant 0 : index
    %9 = vector.load %arg1[%c15, %c0_9] : memref<32x16xf32, #tpu.memory_space<vmem>>, vector<1x4xf32>
    %c16 = arith.constant 16 : index
    %c0_10 = arith.constant 0 : index
    %10 = vector.load %arg1[%c16, %c0_10] : memref<32x16xf32, #tpu.memory_space<vmem>>, vector<1x1xf32>
    %c17 = arith.constant 17 : index
    %c0_11 = arith.constant 0 : index
    %11 = vector.load %arg1[%c17, %c0_11] : memref<32x16xf32, #tpu.memory_space<vmem>>, vector<1x4xf32>
    %c18 = arith.constant 18 : index
    %c0_12 = arith.constant 0 : index
    %12 = vector.load %arg1[%c18, %c0_12] : memref<32x16xf32, #tpu.memory_space<vmem>>, vector<1x4xf32>
    %c24 = arith.constant 24 : index
    %c0_13 = arith.constant 0 : index
    %13 = vector.load %arg1[%c24, %c0_13] : memref<32x16xf32, #tpu.memory_space<vmem>>, vector<8x8xf32>
    %c0_14 = arith.constant 0 : index
    %c0_15 = arith.constant 0 : index
    %14 = vector.load %arg0[%c0_14, %c0_15] : memref<8x8xf32, #tpu.memory_space<vmem>>, vector<8x4xf32>
    %15 = vector.broadcast %11 : vector<1x4xf32> to vector<8x4xf32>
    %16 = arith.addf %14, %15 : vector<8x4xf32>
    %c0_16 = arith.constant 0 : index
    %c4_17 = arith.constant 4 : index
    %17 = vector.load %arg0[%c0_16, %c4_17] : memref<8x8xf32, #tpu.memory_space<vmem>>, vector<8x4xf32>
    %18 = vector.broadcast %12 : vector<1x4xf32> to vector<8x4xf32>
    %19 = arith.addf %17, %18 : vector<8x4xf32>
    %20 = tpu.concatenate %16, %19 in 0 : vector<8x4xf32>, vector<8x4xf32> -> vector<16x4xf32>
    %cst = arith.constant dense<0.000000e+00> : vector<16x12xf32>
    %21 = tpu.matmul %20, %0, %cst {dimension_numbers = #tpu.dot_dimension_numbers<[1], [0], [0], [1], [0, 0, 1, 1], [], []>} : vector<16x4xf32>, vector<4x12xf32>, vector<16x12xf32> -> vector<16x12xf32>
    %22 = vector.broadcast %2 : vector<1x12xf32> to vector<16x12xf32>
    %23 = arith.addf %21, %22 : vector<16x12xf32>
    %24 = vector.extract_strided_slice %23 {offsets = [0, 4], sizes = [16, 8], strides = [1, 1]} : vector<16x12xf32> to vector<16x8xf32>
    %25 = tpu.transpose %24, [1, 0] : vector<16x8xf32> -> vector<8x16xf32>
    %26 = vector.extract_strided_slice %23 {offsets = [0, 0], sizes = [8, 1], strides = [1, 1]} : vector<16x12xf32> to vector<8x1xf32>
    %27 = vector.extract_strided_slice %23 {offsets = [0, 1], sizes = [8, 1], strides = [1, 1]} : vector<16x12xf32> to vector<8x1xf32>
    %28 = vector.extract_strided_slice %25 {offsets = [0, 0], sizes = [1, 8], strides = [1, 1]} : vector<8x16xf32> to vector<1x8xf32>
    %29 = vector.extract_strided_slice %25 {offsets = [1, 0], sizes = [1, 8], strides = [1, 1]} : vector<8x16xf32> to vector<1x8xf32>
    %30 = vector.extract_strided_slice %25 {offsets = [4, 0], sizes = [1, 8], strides = [1, 1]} : vector<8x16xf32> to vector<1x8xf32>
    %31 = vector.extract_strided_slice %25 {offsets = [5, 0], sizes = [1, 8], strides = [1, 1]} : vector<8x16xf32> to vector<1x8xf32>
    %32 = vector.broadcast %26 : vector<8x1xf32> to vector<8x8xf32>
    %33 = vector.broadcast %28 : vector<1x8xf32> to vector<8x8xf32>
    %34 = arith.mulf %32, %33 : vector<8x8xf32>
    %35 = vector.broadcast %27 : vector<8x1xf32> to vector<8x8xf32>
    %36 = vector.broadcast %29 : vector<1x8xf32> to vector<8x8xf32>
    %37 = arith.mulf %35, %36 : vector<8x8xf32>
    %38 = arith.addf %34, %37 : vector<8x8xf32>
    %39 = arith.addf %38, %13 : vector<8x8xf32>
    %cst_18 = arith.constant dense<0xFF800000> : vector<8xf32>
    %40 = vector.multi_reduction <maximumf>, %39, %cst_18 [1] : vector<8x8xf32> to vector<8xf32>
    %41 = vector.shape_cast %40 : vector<8xf32> to vector<8x1xf32>
    %42 = vector.broadcast %41 : vector<8x1xf32> to vector<8x8xf32>
    %43 = arith.subf %39, %42 : vector<8x8xf32>
    %44 = math.exp %43 : vector<8x8xf32>
    %cst_19 = arith.constant dense<0.000000e+00> : vector<8xf32>
    %45 = vector.multi_reduction <add>, %44, %cst_19 [1] : vector<8x8xf32> to vector<8xf32>
    %46 = vector.shape_cast %45 : vector<8xf32> to vector<8x1xf32>
    %47 = tpu.reciprocal %46 {approx = true} : vector<8x1xf32> -> vector<8x1xf32>
    %48 = vector.broadcast %47 : vector<8x1xf32> to vector<8x8xf32>
    %49 = arith.mulf %44, %48 : vector<8x8xf32>
    %50 = vector.broadcast %30 : vector<1x8xf32> to vector<8x8xf32>
    %51 = arith.mulf %49, %50 : vector<8x8xf32>
    %cst_20 = arith.constant dense<0.000000e+00> : vector<8xf32>
    %52 = vector.multi_reduction <add>, %51, %cst_20 [1] : vector<8x8xf32> to vector<8xf32>
    %53 = vector.shape_cast %52 : vector<8xf32> to vector<8x1xf32>
    %54 = vector.broadcast %31 : vector<1x8xf32> to vector<8x8xf32>
    %55 = arith.mulf %49, %54 : vector<8x8xf32>
    %cst_21 = arith.constant dense<0.000000e+00> : vector<8xf32>
    %56 = vector.multi_reduction <add>, %55, %cst_21 [1] : vector<8x8xf32> to vector<8xf32>
    %57 = vector.shape_cast %56 : vector<8xf32> to vector<8x1xf32>
    %58 = tpu.concatenate %53, %57 in 1 : vector<8x1xf32>, vector<8x1xf32> -> vector<8x2xf32>
    %59 = vector.extract_strided_slice %23 {offsets = [0, 2], sizes = [8, 1], strides = [1, 1]} : vector<16x12xf32> to vector<8x1xf32>
    %60 = vector.extract_strided_slice %23 {offsets = [0, 3], sizes = [8, 1], strides = [1, 1]} : vector<16x12xf32> to vector<8x1xf32>
    %61 = vector.extract_strided_slice %25 {offsets = [2, 0], sizes = [1, 8], strides = [1, 1]} : vector<8x16xf32> to vector<1x8xf32>
    %62 = vector.extract_strided_slice %25 {offsets = [3, 0], sizes = [1, 8], strides = [1, 1]} : vector<8x16xf32> to vector<1x8xf32>
    %63 = vector.extract_strided_slice %25 {offsets = [6, 0], sizes = [1, 8], strides = [1, 1]} : vector<8x16xf32> to vector<1x8xf32>
    %64 = vector.extract_strided_slice %25 {offsets = [7, 0], sizes = [1, 8], strides = [1, 1]} : vector<8x16xf32> to vector<1x8xf32>
    %65 = vector.broadcast %59 : vector<8x1xf32> to vector<8x8xf32>
    %66 = vector.broadcast %61 : vector<1x8xf32> to vector<8x8xf32>
    %67 = arith.mulf %65, %66 : vector<8x8xf32>
    %68 = vector.broadcast %60 : vector<8x1xf32> to vector<8x8xf32>
    %69 = vector.broadcast %62 : vector<1x8xf32> to vector<8x8xf32>
    %70 = arith.mulf %68, %69 : vector<8x8xf32>
    %71 = arith.addf %67, %70 : vector<8x8xf32>
    %72 = arith.addf %71, %13 : vector<8x8xf32>
    %cst_22 = arith.constant dense<0xFF800000> : vector<8xf32>
    %73 = vector.multi_reduction <maximumf>, %72, %cst_22 [1] : vector<8x8xf32> to vector<8xf32>
    %74 = vector.shape_cast %73 : vector<8xf32> to vector<8x1xf32>
    %75 = vector.broadcast %74 : vector<8x1xf32> to vector<8x8xf32>
    %76 = arith.subf %72, %75 : vector<8x8xf32>
    %77 = math.exp %76 : vector<8x8xf32>
    %cst_23 = arith.constant dense<0.000000e+00> : vector<8xf32>
    %78 = vector.multi_reduction <add>, %77, %cst_23 [1] : vector<8x8xf32> to vector<8xf32>
    %79 = vector.shape_cast %78 : vector<8xf32> to vector<8x1xf32>
    %80 = tpu.reciprocal %79 {approx = true} : vector<8x1xf32> -> vector<8x1xf32>
    %81 = vector.broadcast %80 : vector<8x1xf32> to vector<8x8xf32>
    %82 = arith.mulf %77, %81 : vector<8x8xf32>
    %83 = vector.broadcast %63 : vector<1x8xf32> to vector<8x8xf32>
    %84 = arith.mulf %82, %83 : vector<8x8xf32>
    %cst_24 = arith.constant dense<0.000000e+00> : vector<8xf32>
    %85 = vector.multi_reduction <add>, %84, %cst_24 [1] : vector<8x8xf32> to vector<8xf32>
    %86 = vector.shape_cast %85 : vector<8xf32> to vector<8x1xf32>
    %87 = vector.broadcast %64 : vector<1x8xf32> to vector<8x8xf32>
    %88 = arith.mulf %82, %87 : vector<8x8xf32>
    %cst_25 = arith.constant dense<0.000000e+00> : vector<8xf32>
    %89 = vector.multi_reduction <add>, %88, %cst_25 [1] : vector<8x8xf32> to vector<8xf32>
    %90 = vector.shape_cast %89 : vector<8xf32> to vector<8x1xf32>
    %91 = tpu.concatenate %86, %90 in 1 : vector<8x1xf32>, vector<8x1xf32> -> vector<8x2xf32>
    %92 = tpu.concatenate %58, %91 in 1 : vector<8x2xf32>, vector<8x2xf32> -> vector<8x4xf32>
    %93 = vector.extract_strided_slice %23 {offsets = [8, 0], sizes = [8, 1], strides = [1, 1]} : vector<16x12xf32> to vector<8x1xf32>
    %94 = vector.extract_strided_slice %23 {offsets = [8, 1], sizes = [8, 1], strides = [1, 1]} : vector<16x12xf32> to vector<8x1xf32>
    %95 = vector.extract_strided_slice %25 {offsets = [0, 8], sizes = [1, 8], strides = [1, 1]} : vector<8x16xf32> to vector<1x8xf32>
    %96 = vector.extract_strided_slice %25 {offsets = [1, 8], sizes = [1, 8], strides = [1, 1]} : vector<8x16xf32> to vector<1x8xf32>
    %97 = vector.extract_strided_slice %25 {offsets = [4, 8], sizes = [1, 8], strides = [1, 1]} : vector<8x16xf32> to vector<1x8xf32>
    %98 = vector.extract_strided_slice %25 {offsets = [5, 8], sizes = [1, 8], strides = [1, 1]} : vector<8x16xf32> to vector<1x8xf32>
    %99 = vector.broadcast %93 : vector<8x1xf32> to vector<8x8xf32>
    %100 = vector.broadcast %95 : vector<1x8xf32> to vector<8x8xf32>
    %101 = arith.mulf %99, %100 : vector<8x8xf32>
    %102 = vector.broadcast %94 : vector<8x1xf32> to vector<8x8xf32>
    %103 = vector.broadcast %96 : vector<1x8xf32> to vector<8x8xf32>
    %104 = arith.mulf %102, %103 : vector<8x8xf32>
    %105 = arith.addf %101, %104 : vector<8x8xf32>
    %106 = arith.addf %105, %13 : vector<8x8xf32>
    %cst_26 = arith.constant dense<0xFF800000> : vector<8xf32>
    %107 = vector.multi_reduction <maximumf>, %106, %cst_26 [1] : vector<8x8xf32> to vector<8xf32>
    %108 = vector.shape_cast %107 : vector<8xf32> to vector<8x1xf32>
    %109 = vector.broadcast %108 : vector<8x1xf32> to vector<8x8xf32>
    %110 = arith.subf %106, %109 : vector<8x8xf32>
    %111 = math.exp %110 : vector<8x8xf32>
    %cst_27 = arith.constant dense<0.000000e+00> : vector<8xf32>
    %112 = vector.multi_reduction <add>, %111, %cst_27 [1] : vector<8x8xf32> to vector<8xf32>
    %113 = vector.shape_cast %112 : vector<8xf32> to vector<8x1xf32>
    %114 = tpu.reciprocal %113 {approx = true} : vector<8x1xf32> -> vector<8x1xf32>
    %115 = vector.broadcast %114 : vector<8x1xf32> to vector<8x8xf32>
    %116 = arith.mulf %111, %115 : vector<8x8xf32>
    %117 = vector.broadcast %97 : vector<1x8xf32> to vector<8x8xf32>
    %118 = arith.mulf %116, %117 : vector<8x8xf32>
    %cst_28 = arith.constant dense<0.000000e+00> : vector<8xf32>
    %119 = vector.multi_reduction <add>, %118, %cst_28 [1] : vector<8x8xf32> to vector<8xf32>
    %120 = vector.shape_cast %119 : vector<8xf32> to vector<8x1xf32>
    %121 = vector.broadcast %98 : vector<1x8xf32> to vector<8x8xf32>
    %122 = arith.mulf %116, %121 : vector<8x8xf32>
    %cst_29 = arith.constant dense<0.000000e+00> : vector<8xf32>
    %123 = vector.multi_reduction <add>, %122, %cst_29 [1] : vector<8x8xf32> to vector<8xf32>
    %124 = vector.shape_cast %123 : vector<8xf32> to vector<8x1xf32>
    %125 = tpu.concatenate %120, %124 in 1 : vector<8x1xf32>, vector<8x1xf32> -> vector<8x2xf32>
    %126 = vector.extract_strided_slice %23 {offsets = [8, 2], sizes = [8, 1], strides = [1, 1]} : vector<16x12xf32> to vector<8x1xf32>
    %127 = vector.extract_strided_slice %23 {offsets = [8, 3], sizes = [8, 1], strides = [1, 1]} : vector<16x12xf32> to vector<8x1xf32>
    %128 = vector.extract_strided_slice %25 {offsets = [2, 8], sizes = [1, 8], strides = [1, 1]} : vector<8x16xf32> to vector<1x8xf32>
    %129 = vector.extract_strided_slice %25 {offsets = [3, 8], sizes = [1, 8], strides = [1, 1]} : vector<8x16xf32> to vector<1x8xf32>
    %130 = vector.extract_strided_slice %25 {offsets = [6, 8], sizes = [1, 8], strides = [1, 1]} : vector<8x16xf32> to vector<1x8xf32>
    %131 = vector.extract_strided_slice %25 {offsets = [7, 8], sizes = [1, 8], strides = [1, 1]} : vector<8x16xf32> to vector<1x8xf32>
    %132 = vector.broadcast %126 : vector<8x1xf32> to vector<8x8xf32>
    %133 = vector.broadcast %128 : vector<1x8xf32> to vector<8x8xf32>
    %134 = arith.mulf %132, %133 : vector<8x8xf32>
    %135 = vector.broadcast %127 : vector<8x1xf32> to vector<8x8xf32>
    %136 = vector.broadcast %129 : vector<1x8xf32> to vector<8x8xf32>
    %137 = arith.mulf %135, %136 : vector<8x8xf32>
    %138 = arith.addf %134, %137 : vector<8x8xf32>
    %139 = arith.addf %138, %13 : vector<8x8xf32>
    %cst_30 = arith.constant dense<0xFF800000> : vector<8xf32>
    %140 = vector.multi_reduction <maximumf>, %139, %cst_30 [1] : vector<8x8xf32> to vector<8xf32>
    %141 = vector.shape_cast %140 : vector<8xf32> to vector<8x1xf32>
    %142 = vector.broadcast %141 : vector<8x1xf32> to vector<8x8xf32>
    %143 = arith.subf %139, %142 : vector<8x8xf32>
    %144 = math.exp %143 : vector<8x8xf32>
    %cst_31 = arith.constant dense<0.000000e+00> : vector<8xf32>
    %145 = vector.multi_reduction <add>, %144, %cst_31 [1] : vector<8x8xf32> to vector<8xf32>
    %146 = vector.shape_cast %145 : vector<8xf32> to vector<8x1xf32>
    %147 = tpu.reciprocal %146 {approx = true} : vector<8x1xf32> -> vector<8x1xf32>
    %148 = vector.broadcast %147 : vector<8x1xf32> to vector<8x8xf32>
    %149 = arith.mulf %144, %148 : vector<8x8xf32>
    %150 = vector.broadcast %130 : vector<1x8xf32> to vector<8x8xf32>
    %151 = arith.mulf %149, %150 : vector<8x8xf32>
    %cst_32 = arith.constant dense<0.000000e+00> : vector<8xf32>
    %152 = vector.multi_reduction <add>, %151, %cst_32 [1] : vector<8x8xf32> to vector<8xf32>
    %153 = vector.shape_cast %152 : vector<8xf32> to vector<8x1xf32>
    %154 = vector.broadcast %131 : vector<1x8xf32> to vector<8x8xf32>
    %155 = arith.mulf %149, %154 : vector<8x8xf32>
    %cst_33 = arith.constant dense<0.000000e+00> : vector<8xf32>
    %156 = vector.multi_reduction <add>, %155, %cst_33 [1] : vector<8x8xf32> to vector<8xf32>
    %157 = vector.shape_cast %156 : vector<8xf32> to vector<8x1xf32>
    %158 = tpu.concatenate %153, %157 in 1 : vector<8x1xf32>, vector<8x1xf32> -> vector<8x2xf32>
    %159 = tpu.concatenate %125, %158 in 1 : vector<8x2xf32>, vector<8x2xf32> -> vector<8x4xf32>
    %160 = tpu.concatenate %92, %159 in 0 : vector<8x4xf32>, vector<8x4xf32> -> vector<16x4xf32>
    %cst_34 = arith.constant dense<0.000000e+00> : vector<16x4xf32>
    %161 = tpu.matmul %160, %1, %cst_34 {dimension_numbers = #tpu.dot_dimension_numbers<[1], [0], [0], [1], [0, 0, 1, 1], [], []>} : vector<16x4xf32>, vector<4x4xf32>, vector<16x4xf32> -> vector<16x4xf32>
    %162 = vector.broadcast %3 : vector<1x4xf32> to vector<16x4xf32>
    %163 = arith.addf %161, %162 : vector<16x4xf32>
    %164 = arith.addf %20, %163 : vector<16x4xf32>
    %cst_35 = arith.constant dense<0.000000e+00> : vector<16xf32>
    %165 = vector.multi_reduction <add>, %164, %cst_35 [1] : vector<16x4xf32> to vector<16xf32>
    %166 = vector.shape_cast %165 : vector<16xf32> to vector<16x1xf32>
    %cst_36 = arith.constant 4.000000e+00 : f32
    %167 = vector.broadcast %cst_36 : f32 to vector<16x1xf32>
    %168 = arith.divf %166, %167 : vector<16x1xf32>
    %169 = vector.broadcast %168 : vector<16x1xf32> to vector<16x4xf32>
    %170 = arith.subf %164, %169 : vector<16x4xf32>
    %171 = arith.mulf %170, %170 : vector<16x4xf32>
    %cst_37 = arith.constant dense<0.000000e+00> : vector<16xf32>
    %172 = vector.multi_reduction <add>, %171, %cst_37 [1] : vector<16x4xf32> to vector<16xf32>
    %173 = vector.shape_cast %172 : vector<16xf32> to vector<16x1xf32>
    %cst_38 = arith.constant 4.000000e+00 : f32
    %174 = vector.broadcast %cst_38 : f32 to vector<16x1xf32>
    %175 = arith.divf %173, %174 : vector<16x1xf32>
    %cst_39 = arith.constant 9.99999974E-6 : f32
    %176 = vector.broadcast %cst_39 : f32 to vector<16x1xf32>
    %177 = arith.addf %175, %176 : vector<16x1xf32>
    %178 = math.rsqrt %177 : vector<16x1xf32>
    %179 = vector.broadcast %178 : vector<16x1xf32> to vector<16x4xf32>
    %180 = arith.mulf %170, %179 : vector<16x4xf32>
    %181 = vector.broadcast %4 : vector<1x4xf32> to vector<16x4xf32>
    %182 = arith.mulf %180, %181 : vector<16x4xf32>
    %183 = vector.broadcast %5 : vector<1x4xf32> to vector<16x4xf32>
    %184 = arith.addf %182, %183 : vector<16x4xf32>
    %c0_40 = arith.constant 0 : index
    %c0_41 = arith.constant 0 : index
    %185 = vector.load %arg2[%c0_40, %c0_41] : memref<9x2048xbf16, #tpu.memory_space<vmem>>, vector<4x2048xbf16>
    %c8_42 = arith.constant 8 : index
    %c0_43 = arith.constant 0 : index
    %186 = vector.load %arg2[%c8_42, %c0_43] : memref<9x2048xbf16, #tpu.memory_space<vmem>>, vector<1x2048xbf16>
    %187 = arith.extf %186 : vector<1x2048xbf16> to vector<1x2048xf32>
    %188 = arith.truncf %184 : vector<16x4xf32> to vector<16x4xbf16>
    %cst_44 = arith.constant dense<0.000000e+00> : vector<16x2048xf32>
    %189 = tpu.matmul %188, %185, %cst_44 {dimension_numbers = #tpu.dot_dimension_numbers<[1], [0], [0], [1], [0, 0, 1, 1], [], []>} : vector<16x4xbf16>, vector<4x2048xbf16>, vector<16x2048xf32> -> vector<16x2048xf32>
    %190 = vector.broadcast %187 : vector<1x2048xf32> to vector<16x2048xf32>
    %191 = arith.addf %189, %190 : vector<16x2048xf32>
    %cst_45 = arith.constant 0.000000e+00 : f32
    %192 = vector.broadcast %cst_45 : f32 to vector<16x2048xf32>
    %193 = arith.maximumf %191, %192 : vector<16x2048xf32>
    %c4_46 = arith.constant 4 : index
    %c0_47 = arith.constant 0 : index
    %194 = vector.load %arg2[%c4_46, %c0_47] : memref<9x2048xbf16, #tpu.memory_space<vmem>>, vector<4x2048xbf16>
    %195 = arith.extf %194 : vector<4x2048xbf16> to vector<4x2048xf32>
    %196 = vector.extract_strided_slice %195 {offsets = [0, 0], sizes = [1, 2048], strides = [1, 1]} : vector<4x2048xf32> to vector<1x2048xf32>
    %197 = vector.broadcast %196 : vector<1x2048xf32> to vector<16x2048xf32>
    %198 = arith.mulf %193, %197 : vector<16x2048xf32>
    %cst_48 = arith.constant dense<0.000000e+00> : vector<16xf32>
    %199 = vector.multi_reduction <add>, %198, %cst_48 [1] : vector<16x2048xf32> to vector<16xf32>
    %200 = vector.shape_cast %199 : vector<16xf32> to vector<16x1xf32>
    %201 = vector.extract_strided_slice %195 {offsets = [1, 0], sizes = [1, 2048], strides = [1, 1]} : vector<4x2048xf32> to vector<1x2048xf32>
    %202 = vector.broadcast %201 : vector<1x2048xf32> to vector<16x2048xf32>
    %203 = arith.mulf %193, %202 : vector<16x2048xf32>
    %cst_49 = arith.constant dense<0.000000e+00> : vector<16xf32>
    %204 = vector.multi_reduction <add>, %203, %cst_49 [1] : vector<16x2048xf32> to vector<16xf32>
    %205 = vector.shape_cast %204 : vector<16xf32> to vector<16x1xf32>
    %206 = vector.extract_strided_slice %195 {offsets = [2, 0], sizes = [1, 2048], strides = [1, 1]} : vector<4x2048xf32> to vector<1x2048xf32>
    %207 = vector.broadcast %206 : vector<1x2048xf32> to vector<16x2048xf32>
    %208 = arith.mulf %193, %207 : vector<16x2048xf32>
    %cst_50 = arith.constant dense<0.000000e+00> : vector<16xf32>
    %209 = vector.multi_reduction <add>, %208, %cst_50 [1] : vector<16x2048xf32> to vector<16xf32>
    %210 = vector.shape_cast %209 : vector<16xf32> to vector<16x1xf32>
    %211 = vector.extract_strided_slice %195 {offsets = [3, 0], sizes = [1, 2048], strides = [1, 1]} : vector<4x2048xf32> to vector<1x2048xf32>
    %212 = vector.broadcast %211 : vector<1x2048xf32> to vector<16x2048xf32>
    %213 = arith.mulf %193, %212 : vector<16x2048xf32>
    %cst_51 = arith.constant dense<0.000000e+00> : vector<16xf32>
    %214 = vector.multi_reduction <add>, %213, %cst_51 [1] : vector<16x2048xf32> to vector<16xf32>
    %215 = vector.shape_cast %214 : vector<16xf32> to vector<16x1xf32>
    %216 = tpu.concatenate %200, %205, %210, %215 in 1 : vector<16x1xf32>, vector<16x1xf32>, vector<16x1xf32>, vector<16x1xf32> -> vector<16x4xf32>
    %217 = vector.broadcast %8 : vector<1x4xf32> to vector<16x4xf32>
    %218 = arith.addf %216, %217 : vector<16x4xf32>
    %219 = arith.addf %184, %218 : vector<16x4xf32>
    %cst_52 = arith.constant dense<0.000000e+00> : vector<16xf32>
    %220 = vector.multi_reduction <add>, %219, %cst_52 [1] : vector<16x4xf32> to vector<16xf32>
    %221 = vector.shape_cast %220 : vector<16xf32> to vector<16x1xf32>
    %cst_53 = arith.constant 4.000000e+00 : f32
    %222 = vector.broadcast %cst_53 : f32 to vector<16x1xf32>
    %223 = arith.divf %221, %222 : vector<16x1xf32>
    %224 = vector.broadcast %223 : vector<16x1xf32> to vector<16x4xf32>
    %225 = arith.subf %219, %224 : vector<16x4xf32>
    %226 = arith.mulf %225, %225 : vector<16x4xf32>
    %cst_54 = arith.constant dense<0.000000e+00> : vector<16xf32>
    %227 = vector.multi_reduction <add>, %226, %cst_54 [1] : vector<16x4xf32> to vector<16xf32>
    %228 = vector.shape_cast %227 : vector<16xf32> to vector<16x1xf32>
    %cst_55 = arith.constant 4.000000e+00 : f32
    %229 = vector.broadcast %cst_55 : f32 to vector<16x1xf32>
    %230 = arith.divf %228, %229 : vector<16x1xf32>
    %cst_56 = arith.constant 9.99999974E-6 : f32
    %231 = vector.broadcast %cst_56 : f32 to vector<16x1xf32>
    %232 = arith.addf %230, %231 : vector<16x1xf32>
    %233 = math.rsqrt %232 : vector<16x1xf32>
    %234 = vector.broadcast %233 : vector<16x1xf32> to vector<16x4xf32>
    %235 = arith.mulf %225, %234 : vector<16x4xf32>
    %236 = vector.broadcast %6 : vector<1x4xf32> to vector<16x4xf32>
    %237 = arith.mulf %235, %236 : vector<16x4xf32>
    %238 = vector.broadcast %7 : vector<1x4xf32> to vector<16x4xf32>
    %239 = arith.addf %237, %238 : vector<16x4xf32>
    %240 = vector.broadcast %9 : vector<1x4xf32> to vector<16x4xf32>
    %241 = arith.mulf %239, %240 : vector<16x4xf32>
    %cst_57 = arith.constant dense<0.000000e+00> : vector<16xf32>
    %242 = vector.multi_reduction <add>, %241, %cst_57 [1] : vector<16x4xf32> to vector<16xf32>
    %243 = vector.shape_cast %242 : vector<16xf32> to vector<16x1xf32>
    %244 = vector.broadcast %10 : vector<1x1xf32> to vector<16x1xf32>
    %245 = arith.addf %243, %244 : vector<16x1xf32>
    %c0_58 = arith.constant 0 : index
    %c0_59 = arith.constant 0 : index
    %246 = vector.load %arg3[%c0_58, %c0_59] : memref<16x1xf32, #tpu.memory_space<vmem>>, vector<16x1xf32>
    tpu.vector_store %arg3[%c0_58, %c0_59], %245 {strides = array<i32>} : memref<16x1xf32, #tpu.memory_space<vmem>>, vector<16x1xf32>,
    return
  }
}

</mosaic_0001>

<llo_original>
// kernel: tpu_custom_call.1
$region0: #{tpu_custom_call.1}
  #allocation0 [shape = 'u32[]', space=smem, size = 0x4, offset = 0x4, fixed_abs, tag = 'smem constant byte address 0x4 - core index']
  #allocation1 [shape = 'u32[144,128]{1,0:T(1,128)}', space=vmem, size = 0x12000, scoped, tag = 'internal scratch']
  %s0 = inlined_call_operand.vmem [shape: f32[8,8], index: 0, kind: input, shape index: {}]
  %s1 = inlined_call_operand.vmem [shape: f32[32,16], index: 1, kind: input, shape index: {}]
  %s2 = inlined_call_operand.hbm [shape: bf16[9,2048], index: 2, kind: input, shape index: {}]
  %s3 = inlined_call_operand.vmem [shape: f32[16,1], index: 3, kind: output, shape index: {}]
  %s4 = sld [smem:[#allocation0]]
  $region26: #{tpu_custom_call.1} parent=0
    _
  %s6 = ssub.s32 1, %s4
  %s7 = scalar_select 0, %s6, %s4
  $region1: #{tpu_custom_call.1} parent=0
    #allocation2 [shape = 'u8[65536]{0}', space=vmem, size = 0x10000, scoped, tag = 'input window, operand 2, single buffered']
    #allocation3 [shape = 's32[1]{0}', space=sflag, size = 0x4, scoped, tag = 'scoped memory for tpu_custom_call.1']
    %8 = vsyncpa [#allocation3], 0
    // Predicated region
    $region2: #{tpu_custom_call.1} parent=1 // pred_check
      _
    $region3: #{tpu_custom_call.1} parent=1 // pred_check_branch
      %10 = sbr.rel (0) target = $region5
    $region4: #{tpu_custom_call.1} parent=1 // pred_region
      _
    $region5: #{tpu_custom_call.1} parent=1 // pred_fallthru
      _
    // Predicated region
    $region6: #{tpu_custom_call.1} parent=1 // pred_check
      _
    $region7: #{tpu_custom_call.1} parent=1 // pred_check_branch
      %12 = sbr.rel (0) target = $region9
    $region8: #{tpu_custom_call.1} parent=1 // pred_region
      _
    $region9: #{tpu_custom_call.1} parent=1 // pred_fallthru
      _
    // Predicated region
    $region10: #{tpu_custom_call.1} parent=1 // pred_check
      _
    $region11: #{tpu_custom_call.1} parent=1 // pred_check_branch
      %14 = sbr.rel (0) target = $region13
    $region12: #{tpu_custom_call.1} parent=1 // pred_region
      %s16 = ssub.s32 2048, 2048
      %17 = vsyncadd [#allocation3], %s16
      %s18 = sshll.u32 [#allocation2], 4
      %s19 = int_to_ptr.vmem [resolvable:$true] %s18
      %24 = dma.hbm_to_vmem [thread:$0]  %s2, 2048, %s19, [#allocation3], 1024, 1024, 64
    $region13: #{tpu_custom_call.1} parent=1 // pred_fallthru
      _
    // Predicated region
    $region14: #{tpu_custom_call.1} parent=1 // pred_check
      _
    $region15: #{tpu_custom_call.1} parent=1 // pred_check_branch
      %26 = sbr.rel (0) target = $region17
    $region16: #{tpu_custom_call.1} parent=1 // pred_region
      %27 = dma.done [#allocation3], 2048
    $region17: #{tpu_custom_call.1} parent=1 // pred_fallthru
      _
    %v29 = vld [vmem:[%s1] sm:$0xf]
    %v30 = vld [vmem:[%s1 + $0x4] sm:$0xf]
    %v31 = vld [vmem:[%s1 + $0x8] sm:$0x1]
    %v32 = vld [vmem:[%s1 + $0x9] sm:$0x1]
    %v33 = vld [vmem:[%s1 + $0xa] sm:$0x1]
    %v34 = vld [vmem:[%s1 + $0xb] sm:$0x1]
    %v35 = vld [vmem:[%s1 + $0xc] sm:$0x1]
    %v36 = vld [vmem:[%s1 + $0xd] sm:$0x1]
    %v37 = vld [vmem:[%s1 + $0xe] sm:$0x1]
    %v38 = vld [vmem:[%s1 + $0xf] sm:$0x1]
    %v39 = vld [vmem:[%s1 + $0x10] sm:$0x1]
    %v40 = vld [vmem:[%s1 + $0x11] sm:$0x1]
    %v41 = vld [vmem:[%s1 + $0x12] sm:$0x1]
    %v42 = vld [vmem:[%s1 + $0x18] sm:$0xff]
    %v43 = vld [vmem:[%s0] sm:$0xff]
    %v44 = vlaneseq
    %v45 = vshrl.u32 %v44, 7
    %v46 = vsub.s32 0, %v45
    %v47 = vrot.slane %v40, %v46
    %v48 = vadd.f32 %v43, %v47
    %v49 = vlaneseq
    %v50 = vshrl.u32 %v49, 7
    %v51 = vsub.s32 0, %v50
    %v52 = vrot.slane %v41, %v51
    %54 = vrot.lane.b32.xlu0 %v52, 4
    %v55 = vpop.permute.xlu0 %54
    %v57 = vadd.f32 %v43, %v55
    %59 = vrot.lane.b32.xlu0 %v57, 124
    %v60 = vpop.permute.xlu0 %59
    %v62 = vlaneseq
    %v63 = vshrl.u32 %v62, 7
    %v64 = vsub.s32 0, %v63
    %v65 = vrot.slane %v31, %v64
    %vm66 = vcmask 31744
    %v68 = vsel %vm66, %v48, 0
    %v70 = vsel %vm66, %v60, 0
    %vm72 = vcmask 1043456
    %v74 = vsel %vm72, %v29, 0
    %76 = vmatprep.subr.mxu0 0.0
    %77 = vmatpush1.msra.mxu0 0.0
    %78 = vmatprep.subr.mxu0 0.0
    %79 = vmatpush1.msra.mxu0 0.0
    %80 = vmatprep.subr.mxu0 0.0
    %81 = vmatpush1.msra.mxu0 0.0
    %82 = vmatprep.subr.mxu0 0.0
    %83 = vmatpush1.msra.mxu0 0.0
    %84 = vmatprep.subr.mxu0 0.0
    %85 = vmatpush1.msra.mxu0 0.0
    %86 = vmatprep.subr.mxu0 0.0
    %87 = vmatpush1.msra.mxu0 0.0
    %88 = vmatprep.subr.mxu0 0.0
    %89 = vmatpush1.msra.mxu0 0.0
    %90 = vmatprep.subr.mxu0 0.0
    %91 = vmatpush1.msra.mxu0 0.0
    %92 = vmatprep.subr.mxu0 0.0
    %93 = vmatpush1.msra.mxu0 0.0
    %94 = vmatprep.subr.mxu0 0.0
    %95 = vmatpush1.msra.mxu0 0.0
    %96 = vmatprep.subr.mxu0 0.0
    %97 = vmatpush1.msra.mxu0 0.0
    %98 = vmatprep.subr.mxu0 0.0
    %99 = vmatpush1.msra.mxu0 0.0
    %100 = vmatprep.subr.mxu0 0.0
    %101 = vmatpush1.msra.mxu0 0.0
    %102 = vmatprep.subr.mxu0 0.0
    %103 = vmatpush1.msra.mxu0 0.0
    %104 = vmatprep.subr.mxu0 0.0
    %105 = vmatpush1.msra.mxu0 0.0
    %106 = vmatprep.subr.mxu0 0.0
    %107 = vmatpush1.msra.mxu0 %v74
    %108 = vmatprep.subr.mxu0 0.0
    %109 = vmatpush2.msra.mxu0 0.0
    %110 = vmatprep.subr.mxu0 0.0
    %111 = vmatpush2.msra.mxu0 0.0
    %112 = vmatprep.subr.mxu0 0.0
    %113 = vmatpush2.msra.mxu0 0.0
    %114 = vmatprep.subr.mxu0 0.0
    %115 = vmatpush2.msra.mxu0 0.0
    %116 = vmatprep.subr.mxu0 0.0
    %117 = vmatpush2.msra.mxu0 0.0
    %118 = vmatprep.subr.mxu0 0.0
    %119 = vmatpush2.msra.mxu0 0.0
    %120 = vmatprep.subr.mxu0 0.0
    %121 = vmatpush2.msra.mxu0 0.0
    %122 = vmatprep.subr.mxu0 0.0
    %123 = vmatpush2.msra.mxu0 0.0
    %124 = vmatprep.subr.mxu0 0.0
    %125 = vmatpush2.msra.mxu0 0.0
    %126 = vmatprep.subr.mxu0 0.0
    %127 = vmatpush2.msra.mxu0 0.0
    %128 = vmatprep.subr.mxu0 0.0
    %129 = vmatpush2.msra.mxu0 0.0
    %130 = vmatprep.subr.mxu0 0.0
    %131 = vmatpush2.msra.mxu0 0.0
    %132 = vmatprep.subr.mxu0 0.0
    %133 = vmatpush2.msra.mxu0 0.0
    %134 = vmatprep.subr.mxu0 0.0
    %135 = vmatpush2.msra.mxu0 0.0
    %136 = vmatprep.subr.mxu0 0.0
    %137 = vmatpush2.msra.mxu0 0.0
    %138 = vmatprep.subr.mxu0 0.0
    %139 = vmatpush2.msra.mxu0 0.0
    %140 = vmatprep.mubr.f32.mxu0 0.0
    %141 = vmatmul.mubr.f32.gmra.mxu0 %v68
    %v142 = vpop.f32.mrf.mxu0
    %v143 = vadd.f32 %v65, %v142
    %v144 = vpop.f32.mrf.mxu0
    %145 = vmatprep.mubr.f32.mxu0 0.0
    %146 = vmatmul.mubr.f32.gmra.mxu0 %v70
    %v147 = vpop.f32.mrf.mxu0
    %v148 = vadd.f32 %v65, %v147
    %v149 = vpop.f32.mrf.mxu0
    %150 = vdwg.mxu0
    %153 = vrot.lane.b32.xlu0 %v143, 124
    %v154 = vpop.permute.xlu0 %153
    %155 = vrot.lane.b32.xlu0 %v148, 124
    %v156 = vpop.permute.xlu0 %155
    %159 = vxpose.xlu0.b32.start [1/16] %v154, 128
    %160 = vxpose.xlu0.b32.cont [2/16] %v156, 128
    %161 = vxpose.xlu0.b32.cont [3/16] 0.0, 128
    %162 = vxpose.xlu0.b32.cont [4/16] 0.0, 128
    %163 = vxpose.xlu0.b32.cont [5/16] 0.0, 128
    %164 = vxpose.xlu0.b32.cont [6/16] 0.0, 128
    %165 = vxpose.xlu0.b32.cont [7/16] 0.0, 128
    %166 = vxpose.xlu0.b32.cont [8/16] 0.0, 128
    %167 = vxpose.xlu0.b32.cont [9/16] 0.0, 128
    %168 = vxpose.xlu0.b32.cont [10/16] 0.0, 128
    %169 = vxpose.xlu0.b32.cont [11/16] 0.0, 128
    %170 = vxpose.xlu0.b32.cont [12/16] 0.0, 128
    %171 = vxpose.xlu0.b32.cont [13/16] 0.0, 128
    %172 = vxpose.xlu0.b32.cont [14/16] 0.0, 128
    %173 = vxpose.xlu0.b32.cont [15/16] 0.0, 128
    %174 = vxpose.xlu0.b32.end [16/16] 0.0, 128
    %v175 = vpop.trf.xlu0
    %v176 = vpop.trf.xlu0
    %v177 = vpop.trf.xlu0
    %v178 = vpop.trf.xlu0
    %v179 = vpop.trf.xlu0
    %v180 = vpop.trf.xlu0
    %v181 = vpop.trf.xlu0
    %v182 = vpop.trf.xlu0
    %v183 = vpop.trf.xlu0
    %v184 = vpop.trf.xlu0
    %v185 = vpop.trf.xlu0
    %v186 = vpop.trf.xlu0
    %v187 = vpop.trf.xlu0
    %v188 = vpop.trf.xlu0
    %v189 = vpop.trf.xlu0
    %v190 = vpop.trf.xlu0
    %191 = vset.pattern.permute.xlu0 0
    %192 = vperm.xlu0 %191, %v143
    %v193 = vpop.permute.xlu0 %192
    %v195 = vlaneseq
    %v196 = vshrl.u32 %v195, 7
    %v197 = vsub.s32 0, %v196
    %v198 = vrot.slane %v175, %v197
    %v199 = vmul.f32 %v193, %v198
    %200 = vset.pattern.permute.xlu0 1
    %201 = vperm.xlu0 %200, %v143
    %v202 = vpop.permute.xlu0 %201
    %v204 = vlaneseq
    %v205 = vshrl.u32 %v204, 7
    %v206 = vsub.s32 1, %v205
    %v207 = vrot.slane %v175, %v206
    %v208 = vmul.f32 %v202, %v207
    %v209 = vadd.f32 %v199, %v208
    %v210 = vadd.f32 %v209, %v42
    %vm211 = vcmask 64512
    %v212 = vsel %vm211, %v210, -inf
    %213 = vmax.xlane.f32.xlu0 %v212
    %v214 = vpop.xlane.xlu0 %213
    %v215 = vsub.f32 %v210, %v214
    %v216 = vmul.f32 %v215, 1.442695
    %v217 = vpow.pop %v216
    %v218 = vsel %vm211, %v217, 0.0
    %219 = vadd.xlane.f32.xlu0 %v218
    %v220 = vpop.xlane.xlu0 %219
    %v221 = vrcp.pop %v220
    %v222 = vmul.f32 %v217, %v221
    %v223 = vlaneseq
    %v224 = vshrl.u32 %v223, 7
    %v225 = vsub.s32 4, %v224
    %v226 = vrot.slane %v175, %v225
    %v227 = vmul.f32 %v222, %v226
    %v228 = vsel %vm211, %v227, 0.0
    %229 = vadd.xlane.f32.xlu0 %v228
    %v230 = vpop.xlane.xlu0 %229
    %v231 = vlaneseq
    %v232 = vshrl.u32 %v231, 7
    %v233 = vsub.s32 5, %v232
    %v234 = vrot.slane %v175, %v233
    %v235 = vmul.f32 %v222, %v234
    %v236 = vsel %vm211, %v235, 0.0
    %237 = vadd.xlane.f32.xlu0 %v236
    %v238 = vpop.xlane.xlu0 %237
    %vm239 = vcmask 7168
    %v240 = vsel %vm239, %v230, %v238
    %241 = vset.pattern.permute.xlu0 2
    %242 = vperm.xlu0 %241, %v143
    %v243 = vpop.permute.xlu0 %242
    %v245 = vlaneseq
    %v246 = vshrl.u32 %v245, 7
    %v247 = vsub.s32 2, %v246
    %v248 = vrot.slane %v175, %v247
    %v249 = vmul.f32 %v243, %v248
    %250 = vset.pattern.permute.xlu0 3
    %251 = vperm.xlu0 %250, %v143
    %v252 = vpop.permute.xlu0 %251
    %v254 = vlaneseq
    %v255 = vshrl.u32 %v254, 7
    %v256 = vsub.s32 3, %v255
    %v257 = vrot.slane %v175, %v256
    %v258 = vmul.f32 %v252, %v257
    %v259 = vadd.f32 %v249, %v258
    %v260 = vadd.f32 %v259, %v42
    %v261 = vsel %vm211, %v260, -inf
    %262 = vmax.xlane.f32.xlu0 %v261
    %v263 = vpop.xlane.xlu0 %262
    %v264 = vsub.f32 %v260, %v263
    %v265 = vmul.f32 %v264, 1.442695
    %v266 = vpow.pop %v265
    %v267 = vsel %vm211, %v266, 0.0
    %268 = vadd.xlane.f32.xlu0 %v267
    %v269 = vpop.xlane.xlu0 %268
    %v270 = vrcp.pop %v269
    %v271 = vmul.f32 %v266, %v270
    %v272 = vlaneseq
    %v273 = vshrl.u32 %v272, 7
    %v274 = vsub.s32 6, %v273
    %v275 = vrot.slane %v175, %v274
    %v276 = vmul.f32 %v271, %v275
    %v277 = vsel %vm211, %v276, 0.0
    %278 = vadd.xlane.f32.xlu0 %v277
    %v279 = vpop.xlane.xlu0 %278
    %v280 = vlaneseq
    %v281 = vshrl.u32 %v280, 7
    %v282 = vsub.s32 7, %v281
    %v283 = vrot.slane %v175, %v282
    %v284 = vmul.f32 %v271, %v283
    %v285 = vsel %vm211, %v284, 0.0
    %286 = vadd.xlane.f32.xlu0 %v285
    %v287 = vpop.xlane.xlu0 %286
    %v288 = vsel %vm239, %v279, %v287
    %290 = vrot.lane.b32.xlu0 %v288, 2
    %v291 = vpop.permute.xlu0 %290
    %vm293 = vcmask 15360
    %v294 = vsel %vm293, %v240, %v291
    %295 = vset.pattern.permute.xlu0 0
    %296 = vperm.xlu0 %295, %v148
    %v297 = vpop.permute.xlu0 %296
    %v299 = vmul.f32 %v297, %v198
    %300 = vset.pattern.permute.xlu0 1
    %301 = vperm.xlu0 %300, %v148
    %v302 = vpop.permute.xlu0 %301
    %v304 = vmul.f32 %v302, %v207
    %v305 = vadd.f32 %v299, %v304
    %307 = vrot.lane.b32.xlu0 %v42, 8
    %v308 = vpop.permute.xlu0 %307
    %v310 = vadd.f32 %v305, %v308
    %vm311 = vcmask 130112
    %v312 = vsel %vm311, %v310, -inf
    %313 = vmax.xlane.f32.xlu0 %v312
    %v314 = vpop.xlane.xlu0 %313
    %v315 = vsub.f32 %v310, %v314
    %v316 = vmul.f32 %v315, 1.442695
    %v317 = vpow.pop %v316
    %319 = vrot.lane.b32.xlu0 %v317, 120
    %v320 = vpop.permute.xlu0 %319
    %v322 = vsel %vm211, %v320, 0.0
    %323 = vadd.xlane.f32.xlu0 %v322
    %v324 = vpop.xlane.xlu0 %323
    %v325 = vrcp.pop %v324
    %v326 = vmul.f32 %v317, %v325
    %v327 = vmul.f32 %v326, %v226
    %329 = vrot.lane.b32.xlu0 %v327, 120
    %v330 = vpop.permute.xlu0 %329
    %v332 = vsel %vm211, %v330, 0.0
    %333 = vadd.xlane.f32.xlu0 %v332
    %v334 = vpop.xlane.xlu0 %333
    %v335 = vmul.f32 %v326, %v234
    %337 = vrot.lane.b32.xlu0 %v335, 120
    %v338 = vpop.permute.xlu0 %337
    %v340 = vsel %vm211, %v338, 0.0
    %341 = vadd.xlane.f32.xlu0 %v340
    %v342 = vpop.xlane.xlu0 %341
    %v343 = vsel %vm239, %v334, %v342
    %344 = vset.pattern.permute.xlu0 2
    %345 = vperm.xlu0 %344, %v148
    %v346 = vpop.permute.xlu0 %345
    %v348 = vmul.f32 %v346, %v248
    %349 = vset.pattern.permute.xlu0 3
    %350 = vperm.xlu0 %349, %v148
    %v351 = vpop.permute.xlu0 %350
    %v353 = vmul.f32 %v351, %v257
    %v354 = vadd.f32 %v348, %v353
    %v355 = vadd.f32 %v354, %v308
    %v356 = vsel %vm311, %v355, -inf
    %357 = vmax.xlane.f32.xlu0 %v356
    %v358 = vpop.xlane.xlu0 %357
    %v359 = vsub.f32 %v355, %v358
    %v360 = vmul.f32 %v359, 1.442695
    %v361 = vpow.pop %v360
    %363 = vrot.lane.b32.xlu0 %v361, 120
    %v364 = vpop.permute.xlu0 %363
    %v366 = vsel %vm211, %v364, 0.0
    %367 = vadd.xlane.f32.xlu0 %v366
    %v368 = vpop.xlane.xlu0 %367
    %v369 = vrcp.pop %v368
    %v370 = vmul.f32 %v361, %v369
    %v371 = vmul.f32 %v370, %v275
    %373 = vrot.lane.b32.xlu0 %v371, 120
    %v374 = vpop.permute.xlu0 %373
    %v376 = vsel %vm211, %v374, 0.0
    %377 = vadd.xlane.f32.xlu0 %v376
    %v378 = vpop.xlane.xlu0 %377
    %v379 = vmul.f32 %v370, %v283
    %381 = vrot.lane.b32.xlu0 %v379, 120
    %v382 = vpop.permute.xlu0 %381
    %v384 = vsel %vm211, %v382, 0.0
    %385 = vadd.xlane.f32.xlu0 %v384
    %v386 = vpop.xlane.xlu0 %385
    %v387 = vsel %vm239, %v378, %v386
    %389 = vrot.lane.b32.xlu0 %v387, 2
    %v390 = vpop.permute.xlu0 %389
    %v392 = vsel %vm293, %v343, %v390
    %v393 = vlaneseq
    %v394 = vshrl.u32 %v393, 7
    %v395 = vsub.s32 0, %v394
    %v396 = vrot.slane %v32, %v395
    %v398 = vsel %vm66, %v294, 0
    %v401 = vsel %vm66, %v392, 0
    %v404 = vsel %vm72, %v30, 0
    %406 = vmatprep.subr.mxu0 0.0
    %407 = vmatpush1.msra.mxu0 0.0
    %408 = vmatprep.subr.mxu0 0.0
    %409 = vmatpush1.msra.mxu0 0.0
    %410 = vmatprep.subr.mxu0 0.0
    %411 = vmatpush1.msra.mxu0 0.0
    %412 = vmatprep.subr.mxu0 0.0
    %413 = vmatpush1.msra.mxu0 0.0
    %414 = vmatprep.subr.mxu0 0.0
    %415 = vmatpush1.msra.mxu0 0.0
    %416 = vmatprep.subr.mxu0 0.0
    %417 = vmatpush1.msra.mxu0 0.0
    %418 = vmatprep.subr.mxu0 0.0
    %419 = vmatpush1.msra.mxu0 0.0
    %420 = vmatprep.subr.mxu0 0.0
    %421 = vmatpush1.msra.mxu0 0.0
    %422 = vmatprep.subr.mxu0 0.0
    %423 = vmatpush1.msra.mxu0 0.0
    %424 = vmatprep.subr.mxu0 0.0
    %425 = vmatpush1.msra.mxu0 0.0
    %426 = vmatprep.subr.mxu0 0.0
    %427 = vmatpush1.msra.mxu0 0.0
    %428 = vmatprep.subr.mxu0 0.0
    %429 = vmatpush1.msra.mxu0 0.0
    %430 = vmatprep.subr.mxu0 0.0
    %431 = vmatpush1.msra.mxu0 0.0
    %432 = vmatprep.subr.mxu0 0.0
    %433 = vmatpush1.msra.mxu0 0.0
    %434 = vmatprep.subr.mxu0 0.0
    %435 = vmatpush1.msra.mxu0 0.0
    %436 = vmatprep.subr.mxu0 0.0
    %437 = vmatpush1.msra.mxu0 %v404
    %438 = vmatprep.subr.mxu0 0.0
    %439 = vmatpush2.msra.mxu0 0.0
    %440 = vmatprep.subr.mxu0 0.0
    %441 = vmatpush2.msra.mxu0 0.0
    %442 = vmatprep.subr.mxu0 0.0
    %443 = vmatpush2.msra.mxu0 0.0
    %444 = vmatprep.subr.mxu0 0.0
    %445 = vmatpush2.msra.mxu0 0.0
    %446 = vmatprep.subr.mxu0 0.0
    %447 = vmatpush2.msra.mxu0 0.0
    %448 = vmatprep.subr.mxu0 0.0
    %449 = vmatpush2.msra.mxu0 0.0
    %450 = vmatprep.subr.mxu0 0.0
    %451 = vmatpush2.msra.mxu0 0.0
    %452 = vmatprep.subr.mxu0 0.0
    %453 = vmatpush2.msra.mxu0 0.0
    %454 = vmatprep.subr.mxu0 0.0
    %455 = vmatpush2.msra.mxu0 0.0
    %456 = vmatprep.subr.mxu0 0.0
    %457 = vmatpush2.msra.mxu0 0.0
    %458 = vmatprep.subr.mxu0 0.0
    %459 = vmatpush2.msra.mxu0 0.0
    %460 = vmatprep.subr.mxu0 0.0
    %461 = vmatpush2.msra.mxu0 0.0
    %462 = vmatprep.subr.mxu0 0.0
    %463 = vmatpush2.msra.mxu0 0.0
    %464 = vmatprep.subr.mxu0 0.0
    %465 = vmatpush2.msra.mxu0 0.0
    %466 = vmatprep.subr.mxu0 0.0
    %467 = vmatpush2.msra.mxu0 0.0
    %468 = vmatprep.subr.mxu0 0.0
    %469 = vmatpush2.msra.mxu0 0.0
    %470 = vmatprep.mubr.f32.mxu0 0.0
    %471 = vmatmul.mubr.f32.gmra.mxu0 %v398
    %v472 = vpop.f32.mrf.mxu0
    %v473 = vadd.f32 %v396, %v472
    %v474 = vpop.f32.mrf.mxu0
    %475 = vmatprep.mubr.f32.mxu0 0.0
    %476 = vmatmul.mubr.f32.gmra.mxu0 %v401
    %v477 = vpop.f32.mrf.mxu0
    %v478 = vadd.f32 %v396, %v477
    %v479 = vpop.f32.mrf.mxu0
    %480 = vdwg.mxu0
    %v481 = vadd.f32 %v48, %v473
    %v482 = vadd.f32 %v60, %v478
    %v483 = vsel %vm66, %v481, 0.0
    %484 = vadd.xlane.f32.xlu0 %v483
    %v485 = vpop.xlane.xlu0 %484
    %v486 = vsel %vm66, %v482, 0.0
    %487 = vadd.xlane.f32.xlu0 %v486
    %v488 = vpop.xlane.xlu0 %487
    %v489 = vrcp.pop 4.0
    %v490 = vmul.f32 %v485, %v489
    %v491 = vmul.f32 %v488, %v489
    %v492 = vsub.f32 %v481, %v490
    %v493 = vsub.f32 %v482, %v491
    %v494 = vmul.f32 %v492, %v492
    %v495 = vmul.f32 %v493, %v493
    %v496 = vsel %vm66, %v494, 0.0
    %497 = vadd.xlane.f32.xlu0 %v496
    %v498 = vpop.xlane.xlu0 %497
    %v499 = vsel %vm66, %v495, 0.0
    %500 = vadd.xlane.f32.xlu0 %v499
    %v501 = vpop.xlane.xlu0 %500
    %v502 = vmul.f32 %v498, %v489
    %v503 = vmul.f32 %v501, %v489
    %v504 = vadd.f32 %v502, 1e-05
    %v505 = vadd.f32 %v503, 1e-05
    %v506 = vrsqrt.pop %v504
    %v507 = vrsqrt.pop %v505
    %v508 = vmul.f32 %v492, %v506
    %v509 = vmul.f32 %v493, %v507
    %v510 = vlaneseq
    %v511 = vshrl.u32 %v510, 7
    %v512 = vsub.s32 0, %v511
    %v513 = vrot.slane %v33, %v512
    %v514 = vmul.f32 %v508, %v513
    %v515 = vmul.f32 %v509, %v513
    %v516 = vlaneseq
    %v517 = vshrl.u32 %v516, 7
    %v518 = vsub.s32 0, %v517
    %v519 = vrot.slane %v34, %v518
    %v520 = vadd.f32 %v514, %v519
    %v521 = vadd.f32 %v515, %v519
    %v522 = vld [vmem:[#allocation2] sm:$0x33]
    %v523 = vld [vmem:[#allocation2 + $0x8] sm:$0x33]
    %v524 = vld [vmem:[#allocation2 + $0x10] sm:$0x33]
    %v525 = vld [vmem:[#allocation2 + $0x18] sm:$0x33]
    %v526 = vld [vmem:[#allocation2 + $0x20] sm:$0x33]
    %v527 = vld [vmem:[#allocation2 + $0x28] sm:$0x33]
    %v528 = vld [vmem:[#allocation2 + $0x30] sm:$0x33]
    %v529 = vld [vmem:[#allocation2 + $0x38] sm:$0x33]
    %v530 = vld [vmem:[#allocation2 + $0x40] sm:$0x11]
    %v531 = vld [vmem:[#allocation2 + $0x48] sm:$0x11]
    %v532 = vld [vmem:[#allocation2 + $0x50] sm:$0x11]
    %v533 = vld [vmem:[#allocation2 + $0x58] sm:$0x11]
    %v534 = vld [vmem:[#allocation2 + $0x60] sm:$0x11]
    %v535 = vld [vmem:[#allocation2 + $0x68] sm:$0x11]
    %v536 = vld [vmem:[#allocation2 + $0x70] sm:$0x11]
    %v537 = vld [vmem:[#allocation2 + $0x78] sm:$0x11]
    %v538 = vunpack.c.l.bf16 %v530
    %v539 = vunpack.c.h.bf16 %v530
    %v540 = vunpack.c.l.bf16 %v531
    %v541 = vunpack.c.h.bf16 %v531
    %v542 = vunpack.c.l.bf16 %v532
    %v543 = vunpack.c.h.bf16 %v532
    %v544 = vunpack.c.l.bf16 %v533
    %v545 = vunpack.c.h.bf16 %v533
    %v546 = vunpack.c.l.bf16 %v534
    %v547 = vunpack.c.h.bf16 %v534
    %v548 = vunpack.c.l.bf16 %v535
    %v549 = vunpack.c.h.bf16 %v535
    %v550 = vunpack.c.l.bf16 %v536
    %v551 = vunpack.c.h.bf16 %v536
    %v552 = vunpack.c.l.bf16 %v537
    %v553 = vunpack.c.h.bf16 %v537
    %v554 = vpack.c.bf16 %v521, %v520
    %v555 = vlaneseq
    %v556 = vshrl.u32 %v555, 7
    %v557 = vsub.s32 0, %v556
    %v558 = vrot.slane %v538, %v557
    %v559 = vlaneseq
    %v560 = vshrl.u32 %v559, 7
    %v561 = vsub.s32 0, %v560
    %v562 = vrot.slane %v539, %v561
    %v563 = vlaneseq
    %v564 = vshrl.u32 %v563, 7
    %v565 = vsub.s32 0, %v564
    %v566 = vrot.slane %v540, %v565
    %v567 = vlaneseq
    %v568 = vshrl.u32 %v567, 7
    %v569 = vsub.s32 0, %v568
    %v570 = vrot.slane %v541, %v569
    %v571 = vlaneseq
    %v572 = vshrl.u32 %v571, 7
    %v573 = vsub.s32 0, %v572
    %v574 = vrot.slane %v542, %v573
    %v575 = vlaneseq
    %v576 = vshrl.u32 %v575, 7
    %v577 = vsub.s32 0, %v576
    %v578 = vrot.slane %v543, %v577
    %v579 = vlaneseq
    %v580 = vshrl.u32 %v579, 7
    %v581 = vsub.s32 0, %v580
    %v582 = vrot.slane %v544, %v581
    %v583 = vlaneseq
    %v584 = vshrl.u32 %v583, 7
    %v585 = vsub.s32 0, %v584
    %v586 = vrot.slane %v545, %v585
    %v587 = vlaneseq
    %v588 = vshrl.u32 %v587, 7
    %v589 = vsub.s32 0, %v588
    %v590 = vrot.slane %v546, %v589
    %v591 = vlaneseq
    %v592 = vshrl.u32 %v591, 7
    %v593 = vsub.s32 0, %v592
    %v594 = vrot.slane %v547, %v593
    %v595 = vlaneseq
    %v596 = vshrl.u32 %v595, 7
    %v597 = vsub.s32 0, %v596
    %v598 = vrot.slane %v548, %v597
    %v599 = vlaneseq
    %v600 = vshrl.u32 %v599, 7
    %v601 = vsub.s32 0, %v600
    %v602 = vrot.slane %v549, %v601
    %v603 = vlaneseq
    %v604 = vshrl.u32 %v603, 7
    %v605 = vsub.s32 0, %v604
    %v606 = vrot.slane %v550, %v605
    %v607 = vlaneseq
    %v608 = vshrl.u32 %v607, 7
    %v609 = vsub.s32 0, %v608
    %v610 = vrot.slane %v551, %v609
    %v611 = vlaneseq
    %v612 = vshrl.u32 %v611, 7
    %v613 = vsub.s32 0, %v612
    %v614 = vrot.slane %v552, %v613
    %v615 = vlaneseq
    %v616 = vshrl.u32 %v615, 7
    %v617 = vsub.s32 0, %v616
    %v618 = vrot.slane %v553, %v617
    %v627 = vunpack.c.l.b16 %v522
    %v628 = vunpack.c.h.b16 %v522
    %v629 = vunpack.c.l.b16 %v523
    %v630 = vunpack.c.h.b16 %v523
    %v631 = vunpack.c.l.b16 %v524
    %v632 = vunpack.c.h.b16 %v524
    %v633 = vunpack.c.l.b16 %v525
    %v634 = vunpack.c.h.b16 %v525
    %v635 = vunpack.c.l.b16 %v526
    %v636 = vunpack.c.h.b16 %v526
    %v637 = vunpack.c.l.b16 %v527
    %v638 = vunpack.c.h.b16 %v527
    %v639 = vunpack.c.l.b16 %v528
    %v640 = vunpack.c.h.b16 %v528
    %v641 = vunpack.c.l.b16 %v529
    %v642 = vunpack.c.h.b16 %v529
    %v643 = vpack.c.b16 %v627, %v627
    %v644 = vpack.c.b16 %v628, %v628
    %v645 = vpack.c.b16 %v629, %v629
    %v646 = vpack.c.b16 %v630, %v630
    %v647 = vpack.c.b16 %v631, %v631
    %v648 = vpack.c.b16 %v632, %v632
    %v649 = vpack.c.b16 %v633, %v633
    %v650 = vpack.c.b16 %v634, %v634
    %v651 = vpack.c.b16 %v635, %v635
    %v652 = vpack.c.b16 %v636, %v636
    %v653 = vpack.c.b16 %v637, %v637
    %v654 = vpack.c.b16 %v638, %v638
    %v655 = vpack.c.b16 %v639, %v639
    %v656 = vpack.c.b16 %v640, %v640
    %v657 = vpack.c.b16 %v641, %v641
    %v658 = vpack.c.b16 %v642, %v642
    %v660 = vsel %vm66, %v554, 0
    %vm662 = vcmask 1041408
    %v664 = vsel %vm662, %v643, 0
    %v667 = vsel %vm662, %v644, 0
    %v670 = vsel %vm662, %v645, 0
    %v673 = vsel %vm662, %v646, 0
    %v676 = vsel %vm662, %v647, 0
    %v679 = vsel %vm662, %v648, 0
    %v682 = vsel %vm662, %v649, 0
    %v685 = vsel %vm662, %v650, 0
    %v688 = vsel %vm662, %v651, 0
    %v691 = vsel %vm662, %v652, 0
    %v694 = vsel %vm662, %v653, 0
    %v697 = vsel %vm662, %v654, 0
    %v700 = vsel %vm662, %v655, 0
    %v703 = vsel %vm662, %v656, 0
    %v706 = vsel %vm662, %v657, 0
    %v709 = vsel %vm662, %v658, 0
    %711 = vmatprep.subr.bf16.mxu0 0
    %712 = vmatpush1.bf16.msra.mxu0 0
    %713 = vmatprep.subr.bf16.mxu0 0
    %714 = vmatpush1.bf16.msra.mxu0 0
    %715 = vmatprep.subr.bf16.mxu0 0
    %716 = vmatpush1.bf16.msra.mxu0 0
    %717 = vmatprep.subr.bf16.mxu0 0
    %718 = vmatpush1.bf16.msra.mxu0 0
    %719 = vmatprep.subr.bf16.mxu0 0
    %720 = vmatpush1.bf16.msra.mxu0 0
    %721 = vmatprep.subr.bf16.mxu0 0
    %722 = vmatpush1.bf16.msra.mxu0 0
    %723 = vmatprep.subr.bf16.mxu0 0
    %724 = vmatpush1.bf16.msra.mxu0 0
    %725 = vmatprep.subr.bf16.mxu0 %v667
    %726 = vmatpush1.bf16.msra.mxu0 %v664
    %727 = vmatprep.subr.bf16.mxu0 0
    %728 = vmatpush2.bf16.msra.mxu0 0
    %729 = vmatprep.subr.bf16.mxu0 0
    %730 = vmatpush2.bf16.msra.mxu0 0
    %731 = vmatprep.subr.bf16.mxu0 0
    %732 = vmatpush2.bf16.msra.mxu0 0
    %733 = vmatprep.subr.bf16.mxu0 0
    %734 = vmatpush2.bf16.msra.mxu0 0
    %735 = vmatprep.subr.bf16.mxu0 0
    %736 = vmatpush2.bf16.msra.mxu0 0
    %737 = vmatprep.subr.bf16.mxu0 0
    %738 = vmatpush2.bf16.msra.mxu0 0
    %739 = vmatprep.subr.bf16.mxu0 0
    %740 = vmatpush2.bf16.msra.mxu0 0
    %741 = vmatprep.subr.bf16.mxu0 0
    %742 = vmatpush2.bf16.msra.mxu0 0
    %743 = vmatprep.mubr.bf16.mxu0 0
    %744 = vmatmul.mubr.bf16.gmra.mxu0 %v660
    %v745 = vpop.f32.mrf.mxu0
    %v746 = vadd.f32 %v558, %v745
    %v747 = vpop.f32.mrf.mxu0
    %v748 = vadd.f32 %v562, %v747
    %v749 = vpop.f32.mrf.mxu0
    %v750 = vadd.f32 %v558, %v749
    %v751 = vpop.f32.mrf.mxu0
    %v752 = vadd.f32 %v562, %v751
    %753 = vdwg.mxu0
    %754 = vmatprep.subr.bf16.mxu0 0
    %755 = vmatpush1.bf16.msra.mxu0 0
    %756 = vmatprep.subr.bf16.mxu0 0
    %757 = vmatpush1.bf16.msra.mxu0 0
    %758 = vmatprep.subr.bf16.mxu0 0
    %759 = vmatpush1.bf16.msra.mxu0 0
    %760 = vmatprep.subr.bf16.mxu0 0
    %761 = vmatpush1.bf16.msra.mxu0 0
    %762 = vmatprep.subr.bf16.mxu0 0
    %763 = vmatpush1.bf16.msra.mxu0 0
    %764 = vmatprep.subr.bf16.mxu0 0
    %765 = vmatpush1.bf16.msra.mxu0 0
    %766 = vmatprep.subr.bf16.mxu0 0
    %767 = vmatpush1.bf16.msra.mxu0 0
    %768 = vmatprep.subr.bf16.mxu0 %v673
    %769 = vmatpush1.bf16.msra.mxu0 %v670
    %770 = vmatprep.subr.bf16.mxu0 0
    %771 = vmatpush2.bf16.msra.mxu0 0
    %772 = vmatprep.subr.bf16.mxu0 0
    %773 = vmatpush2.bf16.msra.mxu0 0
    %774 = vmatprep.subr.bf16.mxu0 0
    %775 = vmatpush2.bf16.msra.mxu0 0
    %776 = vmatprep.subr.bf16.mxu0 0
    %777 = vmatpush2.bf16.msra.mxu0 0
    %778 = vmatprep.subr.bf16.mxu0 0
    %779 = vmatpush2.bf16.msra.mxu0 0
    %780 = vmatprep.subr.bf16.mxu0 0
    %781 = vmatpush2.bf16.msra.mxu0 0
    %782 = vmatprep.subr.bf16.mxu0 0
    %783 = vmatpush2.bf16.msra.mxu0 0
    %784 = vmatprep.subr.bf16.mxu0 0
    %785 = vmatpush2.bf16.msra.mxu0 0
    %786 = vmatprep.mubr.bf16.mxu0 0
    %787 = vmatmul.mubr.bf16.gmra.mxu0 %v660
    %v788 = vpop.f32.mrf.mxu0
    %v789 = vadd.f32 %v566, %v788
    %v790 = vpop.f32.mrf.mxu0
    %v791 = vadd.f32 %v570, %v790
    %v792 = vpop.f32.mrf.mxu0
    %v793 = vadd.f32 %v566, %v792
    %v794 = vpop.f32.mrf.mxu0
    %v795 = vadd.f32 %v570, %v794
    %796 = vdwg.mxu0
    %797 = vmatprep.subr.bf16.mxu0 0
    %798 = vmatpush1.bf16.msra.mxu0 0
    %799 = vmatprep.subr.bf16.mxu0 0
    %800 = vmatpush1.bf16.msra.mxu0 0
    %801 = vmatprep.subr.bf16.mxu0 0
    %802 = vmatpush1.bf16.msra.mxu0 0
    %803 = vmatprep.subr.bf16.mxu0 0
    %804 = vmatpush1.bf16.msra.mxu0 0
    %805 = vmatprep.subr.bf16.mxu0 0
    %806 = vmatpush1.bf16.msra.mxu0 0
    %807 = vmatprep.subr.bf16.mxu0 0
    %808 = vmatpush1.bf16.msra.mxu0 0
    %809 = vmatprep.subr.bf16.mxu0 0
    %810 = vmatpush1.bf16.msra.mxu0 0
    %811 = vmatprep.subr.bf16.mxu0 %v679
    %812 = vmatpush1.bf16.msra.mxu0 %v676
    %813 = vmatprep.subr.bf16.mxu0 0
    %814 = vmatpush2.bf16.msra.mxu0 0
    %815 = vmatprep.subr.bf16.mxu0 0
    %816 = vmatpush2.bf16.msra.mxu0 0
    %817 = vmatprep.subr.bf16.mxu0 0
    %818 = vmatpush2.bf16.msra.mxu0 0
    %819 = vmatprep.subr.bf16.mxu0 0
    %820 = vmatpush2.bf16.msra.mxu0 0
    %821 = vmatprep.subr.bf16.mxu0 0
    %822 = vmatpush2.bf16.msra.mxu0 0
    %823 = vmatprep.subr.bf16.mxu0 0
    %824 = vmatpush2.bf16.msra.mxu0 0
    %825 = vmatprep.subr.bf16.mxu0 0
    %826 = vmatpush2.bf16.msra.mxu0 0
    %827 = vmatprep.subr.bf16.mxu0 0
    %828 = vmatpush2.bf16.msra.mxu0 0
    %829 = vmatprep.mubr.bf16.mxu0 0
    %830 = vmatmul.mubr.bf16.gmra.mxu0 %v660
    %v831 = vpop.f32.mrf.mxu0
    %v832 = vadd.f32 %v574, %v831
    %v833 = vpop.f32.mrf.mxu0
    %v834 = vadd.f32 %v578, %v833
    %v835 = vpop.f32.mrf.mxu0
    %v836 = vadd.f32 %v574, %v835
    %v837 = vpop.f32.mrf.mxu0
    %v838 = vadd.f32 %v578, %v837
    %839 = vdwg.mxu0
    %840 = vmatprep.subr.bf16.mxu0 0
    %841 = vmatpush1.bf16.msra.mxu0 0
    %842 = vmatprep.subr.bf16.mxu0 0
    %843 = vmatpush1.bf16.msra.mxu0 0
    %844 = vmatprep.subr.bf16.mxu0 0
    %845 = vmatpush1.bf16.msra.mxu0 0
    %846 = vmatprep.subr.bf16.mxu0 0
    %847 = vmatpush1.bf16.msra.mxu0 0
    %848 = vmatprep.subr.bf16.mxu0 0
    %849 = vmatpush1.bf16.msra.mxu0 0
    %850 = vmatprep.subr.bf16.mxu0 0
    %851 = vmatpush1.bf16.msra.mxu0 0
    %852 = vmatprep.subr.bf16.mxu0 0
    %853 = vmatpush1.bf16.msra.mxu0 0
    %854 = vmatprep.subr.bf16.mxu0 %v685
    %855 = vmatpush1.bf16.msra.mxu0 %v682
    %856 = vmatprep.subr.bf16.mxu0 0
    %857 = vmatpush2.bf16.msra.mxu0 0
    %858 = vmatprep.subr.bf16.mxu0 0
    %859 = vmatpush2.bf16.msra.mxu0 0
    %860 = vmatprep.subr.bf16.mxu0 0
    %861 = vmatpush2.bf16.msra.mxu0 0
    %862 = vmatprep.subr.bf16.mxu0 0
    %863 = vmatpush2.bf16.msra.mxu0 0
    %864 = vmatprep.subr.bf16.mxu0 0
    %865 = vmatpush2.bf16.msra.mxu0 0
    %866 = vmatprep.subr.bf16.mxu0 0
    %867 = vmatpush2.bf16.msra.mxu0 0
    %868 = vmatprep.subr.bf16.mxu0 0
    %869 = vmatpush2.bf16.msra.mxu0 0
    %870 = vmatprep.subr.bf16.mxu0 0
    %871 = vmatpush2.bf16.msra.mxu0 0
    %872 = vmatprep.mubr.bf16.mxu0 0
    %873 = vmatmul.mubr.bf16.gmra.mxu0 %v660
    %v874 = vpop.f32.mrf.mxu0
    %v875 = vadd.f32 %v582, %v874
    %v876 = vpop.f32.mrf.mxu0
    %v877 = vadd.f32 %v586, %v876
    %v878 = vpop.f32.mrf.mxu0
    %v879 = vadd.f32 %v582, %v878
    %v880 = vpop.f32.mrf.mxu0
    %v881 = vadd.f32 %v586, %v880
    %882 = vdwg.mxu0
    %883 = vmatprep.subr.bf16.mxu0 0
    %884 = vmatpush1.bf16.msra.mxu0 0
    %885 = vmatprep.subr.bf16.mxu0 0
    %886 = vmatpush1.bf16.msra.mxu0 0
    %887 = vmatprep.subr.bf16.mxu0 0
    %888 = vmatpush1.bf16.msra.mxu0 0
    %889 = vmatprep.subr.bf16.mxu0 0
    %890 = vmatpush1.bf16.msra.mxu0 0
    %891 = vmatprep.subr.bf16.mxu0 0
    %892 = vmatpush1.bf16.msra.mxu0 0
    %893 = vmatprep.subr.bf16.mxu0 0
    %894 = vmatpush1.bf16.msra.mxu0 0
    %895 = vmatprep.subr.bf16.mxu0 0
    %896 = vmatpush1.bf16.msra.mxu0 0
    %897 = vmatprep.subr.bf16.mxu0 %v691
    %898 = vmatpush1.bf16.msra.mxu0 %v688
    %899 = vmatprep.subr.bf16.mxu0 0
    %900 = vmatpush2.bf16.msra.mxu0 0
    %901 = vmatprep.subr.bf16.mxu0 0
    %902 = vmatpush2.bf16.msra.mxu0 0
    %903 = vmatprep.subr.bf16.mxu0 0
    %904 = vmatpush2.bf16.msra.mxu0 0
    %905 = vmatprep.subr.bf16.mxu0 0
    %906 = vmatpush2.bf16.msra.mxu0 0
    %907 = vmatprep.subr.bf16.mxu0 0
    %908 = vmatpush2.bf16.msra.mxu0 0
    %909 = vmatprep.subr.bf16.mxu0 0
    %910 = vmatpush2.bf16.msra.mxu0 0
    %911 = vmatprep.subr.bf16.mxu0 0
    %912 = vmatpush2.bf16.msra.mxu0 0
    %913 = vmatprep.subr.bf16.mxu0 0
    %914 = vmatpush2.bf16.msra.mxu0 0
    %915 = vmatprep.mubr.bf16.mxu0 0
    %916 = vmatmul.mubr.bf16.gmra.mxu0 %v660
    %v917 = vpop.f32.mrf.mxu0
    %v918 = vadd.f32 %v590, %v917
    %v919 = vpop.f32.mrf.mxu0
    %v920 = vadd.f32 %v594, %v919
    %v921 = vpop.f32.mrf.mxu0
    %v922 = vadd.f32 %v590, %v921
    %v923 = vpop.f32.mrf.mxu0
    %v924 = vadd.f32 %v594, %v923
    %925 = vdwg.mxu0
    %926 = vmatprep.subr.bf16.mxu0 0
    %927 = vmatpush1.bf16.msra.mxu0 0
    %928 = vmatprep.subr.bf16.mxu0 0
    %929 = vmatpush1.bf16.msra.mxu0 0
    %930 = vmatprep.subr.bf16.mxu0 0
    %931 = vmatpush1.bf16.msra.mxu0 0
    %932 = vmatprep.subr.bf16.mxu0 0
    %933 = vmatpush1.bf16.msra.mxu0 0
    %934 = vmatprep.subr.bf16.mxu0 0
    %935 = vmatpush1.bf16.msra.mxu0 0
    %936 = vmatprep.subr.bf16.mxu0 0
    %937 = vmatpush1.bf16.msra.mxu0 0
    %938 = vmatprep.subr.bf16.mxu0 0
    %939 = vmatpush1.bf16.msra.mxu0 0
    %940 = vmatprep.subr.bf16.mxu0 %v697
    %941 = vmatpush1.bf16.msra.mxu0 %v694
    %942 = vmatprep.subr.bf16.mxu0 0
    %943 = vmatpush2.bf16.msra.mxu0 0
    %944 = vmatprep.subr.bf16.mxu0 0
    %945 = vmatpush2.bf16.msra.mxu0 0
    %946 = vmatprep.subr.bf16.mxu0 0
    %947 = vmatpush2.bf16.msra.mxu0 0
    %948 = vmatprep.subr.bf16.mxu0 0
    %949 = vmatpush2.bf16.msra.mxu0 0
    %950 = vmatprep.subr.bf16.mxu0 0
    %951 = vmatpush2.bf16.msra.mxu0 0
    %952 = vmatprep.subr.bf16.mxu0 0
    %953 = vmatpush2.bf16.msra.mxu0 0
    %954 = vmatprep.subr.bf16.mxu0 0
    %955 = vmatpush2.bf16.msra.mxu0 0
    %956 = vmatprep.subr.bf16.mxu0 0
    %957 = vmatpush2.bf16.msra.mxu0 0
    %958 = vmatprep.mubr.bf16.mxu0 0
    %959 = vmatmul.mubr.bf16.gmra.mxu0 %v660
    %v960 = vpop.f32.mrf.mxu0
    %v961 = vadd.f32 %v598, %v960
    %v962 = vpop.f32.mrf.mxu0
    %v963 = vadd.f32 %v602, %v962
    %v964 = vpop.f32.mrf.mxu0
    %v965 = vadd.f32 %v598, %v964
    %v966 = vpop.f32.mrf.mxu0
    %v967 = vadd.f32 %v602, %v966
    %968 = vdwg.mxu0
    %969 = vmatprep.subr.bf16.mxu0 0
    %970 = vmatpush1.bf16.msra.mxu0 0
    %971 = vmatprep.subr.bf16.mxu0 0
    %972 = vmatpush1.bf16.msra.mxu0 0
    %973 = vmatprep.subr.bf16.mxu0 0
    %974 = vmatpush1.bf16.msra.mxu0 0
    %975 = vmatprep.subr.bf16.mxu0 0
    %976 = vmatpush1.bf16.msra.mxu0 0
    %977 = vmatprep.subr.bf16.mxu0 0
    %978 = vmatpush1.bf16.msra.mxu0 0
    %979 = vmatprep.subr.bf16.mxu0 0
    %980 = vmatpush1.bf16.msra.mxu0 0
    %981 = vmatprep.subr.bf16.mxu0 0
    %982 = vmatpush1.bf16.msra.mxu0 0
    %983 = vmatprep.subr.bf16.mxu0 %v703
    %984 = vmatpush1.bf16.msra.mxu0 %v700
    %985 = vmatprep.subr.bf16.mxu0 0
    %986 = vmatpush2.bf16.msra.mxu0 0
    %987 = vmatprep.subr.bf16.mxu0 0
    %988 = vmatpush2.bf16.msra.mxu0 0
    %989 = vmatprep.subr.bf16.mxu0 0
    %990 = vmatpush2.bf16.msra.mxu0 0
    %991 = vmatprep.subr.bf16.mxu0 0
    %992 = vmatpush2.bf16.msra.mxu0 0
    %993 = vmatprep.subr.bf16.mxu0 0
    %994 = vmatpush2.bf16.msra.mxu0 0
    %995 = vmatprep.subr.bf16.mxu0 0
    %996 = vmatpush2.bf16.msra.mxu0 0
    %997 = vmatprep.subr.bf16.mxu0 0
    %998 = vmatpush2.bf16.msra.mxu0 0
    %999 = vmatprep.subr.bf16.mxu0 0
    %1000 = vmatpush2.bf16.msra.mxu0 0
    %1001 = vmatprep.mubr.bf16.mxu0 0
    %1002 = vmatmul.mubr.bf16.gmra.mxu0 %v660
    %v1003 = vpop.f32.mrf.mxu0
    %v1004 = vadd.f32 %v606, %v1003
    %v1005 = vpop.f32.mrf.mxu0
    %v1006 = vadd.f32 %v610, %v1005
    %v1007 = vpop.f32.mrf.mxu0
    %v1008 = vadd.f32 %v606, %v1007
    %v1009 = vpop.f32.mrf.mxu0
    %v1010 = vadd.f32 %v610, %v1009
    %1011 = vdwg.mxu0
    %1012 = vmatprep.subr.bf16.mxu0 0
    %1013 = vmatpush1.bf16.msra.mxu0 0
    %1014 = vmatprep.subr.bf16.mxu0 0
    %1015 = vmatpush1.bf16.msra.mxu0 0
    %1016 = vmatprep.subr.bf16.mxu0 0
    %1017 = vmatpush1.bf16.msra.mxu0 0
    %1018 = vmatprep.subr.bf16.mxu0 0
    %1019 = vmatpush1.bf16.msra.mxu0 0
    %1020 = vmatprep.subr.bf16.mxu0 0
    %1021 = vmatpush1.bf16.msra.mxu0 0
    %1022 = vmatprep.subr.bf16.mxu0 0
    %1023 = vmatpush1.bf16.msra.mxu0 0
    %1024 = vmatprep.subr.bf16.mxu0 0
    %1025 = vmatpush1.bf16.msra.mxu0 0
    %1026 = vmatprep.subr.bf16.mxu0 %v709
    %1027 = vmatpush1.bf16.msra.mxu0 %v706
    %1028 = vmatprep.subr.bf16.mxu0 0
    %1029 = vmatpush2.bf16.msra.mxu0 0
    %1030 = vmatprep.subr.bf16.mxu0 0
    %1031 = vmatpush2.bf16.msra.mxu0 0
    %1032 = vmatprep.subr.bf16.mxu0 0
    %1033 = vmatpush2.bf16.msra.mxu0 0
    %1034 = vmatprep.subr.bf16.mxu0 0
    %1035 = vmatpush2.bf16.msra.mxu0 0
    %1036 = vmatprep.subr.bf16.mxu0 0
    %1037 = vmatpush2.bf16.msra.mxu0 0
    %1038 = vmatprep.subr.bf16.mxu0 0
    %1039 = vmatpush2.bf16.msra.mxu0 0
    %1040 = vmatprep.subr.bf16.mxu0 0
    %1041 = vmatpush2.bf16.msra.mxu0 0
    %1042 = vmatprep.subr.bf16.mxu0 0
    %1043 = vmatpush2.bf16.msra.mxu0 0
    %1044 = vmatprep.mubr.bf16.mxu0 0
    %1045 = vmatmul.mubr.bf16.gmra.mxu0 %v660
    %v1046 = vpop.f32.mrf.mxu0
    %v1047 = vadd.f32 %v614, %v1046
    %v1048 = vpop.f32.mrf.mxu0
    %v1049 = vadd.f32 %v618, %v1048
    %v1050 = vpop.f32.mrf.mxu0
    %v1051 = vadd.f32 %v614, %v1050
    %v1052 = vpop.f32.mrf.mxu0
    %v1053 = vadd.f32 %v618, %v1052
    %1054 = vdwg.mxu0
    %v1055 = vmax.f32 %v746, 0.0
    %v1056 = vmax.f32 %v748, 0.0
    %v1057 = vmax.f32 %v789, 0.0
    %v1058 = vmax.f32 %v791, 0.0
    %v1059 = vmax.f32 %v832, 0.0
    %v1060 = vmax.f32 %v834, 0.0
    %v1061 = vmax.f32 %v875, 0.0
    %v1062 = vmax.f32 %v877, 0.0
    %v1063 = vmax.f32 %v918, 0.0
    %v1064 = vmax.f32 %v920, 0.0
    %v1065 = vmax.f32 %v961, 0.0
    %v1066 = vmax.f32 %v963, 0.0
    %v1067 = vmax.f32 %v1004, 0.0
    %v1068 = vmax.f32 %v1006, 0.0
    %v1069 = vmax.f32 %v1047, 0.0
    %v1070 = vmax.f32 %v1049, 0.0
    %v1071 = vmax.f32 %v750, 0.0
    %v1072 = vmax.f32 %v752, 0.0
    %v1073 = vmax.f32 %v793, 0.0
    %v1074 = vmax.f32 %v795, 0.0
    %v1075 = vmax.f32 %v836, 0.0
    %v1076 = vmax.f32 %v838, 0.0
    %v1077 = vmax.f32 %v879, 0.0
    %v1078 = vmax.f32 %v881, 0.0
    %v1079 = vmax.f32 %v922, 0.0
    %v1080 = vmax.f32 %v924, 0.0
    %v1081 = vmax.f32 %v965, 0.0
    %v1082 = vmax.f32 %v967, 0.0
    %v1083 = vmax.f32 %v1008, 0.0
    %v1084 = vmax.f32 %v1010, 0.0
    %v1085 = vmax.f32 %v1051, 0.0
    %v1086 = vmax.f32 %v1053, 0.0
    %v1087 = vld [vmem:[#allocation2] sm:$0xcc]
    %v1088 = vld [vmem:[#allocation2 + $0x8] sm:$0xcc]
    %v1089 = vld [vmem:[#allocation2 + $0x10] sm:$0xcc]
    %v1090 = vld [vmem:[#allocation2 + $0x18] sm:$0xcc]
    %v1091 = vld [vmem:[#allocation2 + $0x20] sm:$0xcc]
    %v1092 = vld [vmem:[#allocation2 + $0x28] sm:$0xcc]
    %v1093 = vld [vmem:[#allocation2 + $0x30] sm:$0xcc]
    %v1094 = vld [vmem:[#allocation2 + $0x38] sm:$0xcc]
    %v1095 = vunpack.c.l.bf16 %v1087
    %v1096 = vunpack.c.h.bf16 %v1087
    %v1097 = vunpack.c.l.bf16 %v1088
    %v1098 = vunpack.c.h.bf16 %v1088
    %v1099 = vunpack.c.l.bf16 %v1089
    %v1100 = vunpack.c.h.bf16 %v1089
    %v1101 = vunpack.c.l.bf16 %v1090
    %v1102 = vunpack.c.h.bf16 %v1090
    %v1103 = vunpack.c.l.bf16 %v1091
    %v1104 = vunpack.c.h.bf16 %v1091
    %v1105 = vunpack.c.l.bf16 %v1092
    %v1106 = vunpack.c.h.bf16 %v1092
    %v1107 = vunpack.c.l.bf16 %v1093
    %v1108 = vunpack.c.h.bf16 %v1093
    %v1109 = vunpack.c.l.bf16 %v1094
    %v1110 = vunpack.c.h.bf16 %v1094
    %v1111 = vlaneseq
    %v1112 = vshrl.u32 %v1111, 7
    %v1113 = vsub.s32 4, %v1112
    %v1114 = vrot.slane %v1095, %v1113
    %v1115 = vlaneseq
    %v1116 = vshrl.u32 %v1115, 7
    %v1117 = vsub.s32 4, %v1116
    %v1118 = vrot.slane %v1096, %v1117
    %v1119 = vlaneseq
    %v1120 = vshrl.u32 %v1119, 7
    %v1121 = vsub.s32 4, %v1120
    %v1122 = vrot.slane %v1097, %v1121
    %v1123 = vlaneseq
    %v1124 = vshrl.u32 %v1123, 7
    %v1125 = vsub.s32 4, %v1124
    %v1126 = vrot.slane %v1098, %v1125
    %v1127 = vlaneseq
    %v1128 = vshrl.u32 %v1127, 7
    %v1129 = vsub.s32 4, %v1128
    %v1130 = vrot.slane %v1099, %v1129
    %v1131 = vlaneseq
    %v1132 = vshrl.u32 %v1131, 7
    %v1133 = vsub.s32 4, %v1132
    %v1134 = vrot.slane %v1100, %v1133
    %v1135 = vlaneseq
    %v1136 = vshrl.u32 %v1135, 7
    %v1137 = vsub.s32 4, %v1136
    %v1138 = vrot.slane %v1101, %v1137
    %v1139 = vlaneseq
    %v1140 = vshrl.u32 %v1139, 7
    %v1141 = vsub.s32 4, %v1140
    %v1142 = vrot.slane %v1102, %v1141
    %v1143 = vlaneseq
    %v1144 = vshrl.u32 %v1143, 7
    %v1145 = vsub.s32 4, %v1144
    %v1146 = vrot.slane %v1103, %v1145
    %v1147 = vlaneseq
    %v1148 = vshrl.u32 %v1147, 7
    %v1149 = vsub.s32 4, %v1148
    %v1150 = vrot.slane %v1104, %v1149
    %v1151 = vlaneseq
    %v1152 = vshrl.u32 %v1151, 7
    %v1153 = vsub.s32 4, %v1152
    %v1154 = vrot.slane %v1105, %v1153
    %v1155 = vlaneseq
    %v1156 = vshrl.u32 %v1155, 7
    %v1157 = vsub.s32 4, %v1156
    %v1158 = vrot.slane %v1106, %v1157
    %v1159 = vlaneseq
    %v1160 = vshrl.u32 %v1159, 7
    %v1161 = vsub.s32 4, %v1160
    %v1162 = vrot.slane %v1107, %v1161
    %v1163 = vlaneseq
    %v1164 = vshrl.u32 %v1163, 7
    %v1165 = vsub.s32 4, %v1164
    %v1166 = vrot.slane %v1108, %v1165
    %v1167 = vlaneseq
    %v1168 = vshrl.u32 %v1167, 7
    %v1169 = vsub.s32 4, %v1168
    %v1170 = vrot.slane %v1109, %v1169
    %v1171 = vlaneseq
    %v1172 = vshrl.u32 %v1171, 7
    %v1173 = vsub.s32 4, %v1172
    %v1174 = vrot.slane %v1110, %v1173
    %v1175 = vmul.f32 %v1055, %v1114
    %v1176 = vmul.f32 %v1056, %v1118
    %v1177 = vmul.f32 %v1057, %v1122
    %v1178 = vmul.f32 %v1058, %v1126
    %v1179 = vmul.f32 %v1059, %v1130
    %v1180 = vmul.f32 %v1060, %v1134
    %v1181 = vmul.f32 %v1061, %v1138
    %v1182 = vmul.f32 %v1062, %v1142
    %v1183 = vmul.f32 %v1063, %v1146
    %v1184 = vmul.f32 %v1064, %v1150
    %v1185 = vmul.f32 %v1065, %v1154
    %v1186 = vmul.f32 %v1066, %v1158
    %v1187 = vmul.f32 %v1067, %v1162
    %v1188 = vmul.f32 %v1068, %v1166
    %v1189 = vmul.f32 %v1069, %v1170
    %v1190 = vmul.f32 %v1070, %v1174
    %v1191 = vmul.f32 %v1071, %v1114
    %v1192 = vmul.f32 %v1072, %v1118
    %v1193 = vmul.f32 %v1073, %v1122
    %v1194 = vmul.f32 %v1074, %v1126
    %v1195 = vmul.f32 %v1075, %v1130
    %v1196 = vmul.f32 %v1076, %v1134
    %v1197 = vmul.f32 %v1077, %v1138
    %v1198 = vmul.f32 %v1078, %v1142
    %v1199 = vmul.f32 %v1079, %v1146
    %v1200 = vmul.f32 %v1080, %v1150
    %v1201 = vmul.f32 %v1081, %v1154
    %v1202 = vmul.f32 %v1082, %v1158
    %v1203 = vmul.f32 %v1083, %v1162
    %v1204 = vmul.f32 %v1084, %v1166
    %v1205 = vmul.f32 %v1085, %v1170
    %v1206 = vmul.f32 %v1086, %v1174
    %v1207 = vadd.f32 %v1175, %v1176
    %v1208 = vadd.f32 %v1207, %v1177
    %v1209 = vadd.f32 %v1208, %v1178
    %v1210 = vadd.f32 %v1209, %v1179
    %v1211 = vadd.f32 %v1210, %v1180
    %v1212 = vadd.f32 %v1211, %v1181
    %v1213 = vadd.f32 %v1212, %v1182
    %v1214 = vadd.f32 %v1213, %v1183
    %v1215 = vadd.f32 %v1214, %v1184
    %v1216 = vadd.f32 %v1215, %v1185
    %v1217 = vadd.f32 %v1216, %v1186
    %v1218 = vadd.f32 %v1217, %v1187
    %v1219 = vadd.f32 %v1218, %v1188
    %v1220 = vadd.f32 %v1219, %v1189
    %v1221 = vadd.f32 %v1220, %v1190
    %1222 = vadd.xlane.f32.xlu0 %v1221
    %v1223 = vpop.xlane.xlu0 %1222
    %v1224 = vadd.f32 %v1191, %v1192
    %v1225 = vadd.f32 %v1224, %v1193
    %v1226 = vadd.f32 %v1225, %v1194
    %v1227 = vadd.f32 %v1226, %v1195
    %v1228 = vadd.f32 %v1227, %v1196
    %v1229 = vadd.f32 %v1228, %v1197
    %v1230 = vadd.f32 %v1229, %v1198
    %v1231 = vadd.f32 %v1230, %v1199
    %v1232 = vadd.f32 %v1231, %v1200
    %v1233 = vadd.f32 %v1232, %v1201
    %v1234 = vadd.f32 %v1233, %v1202
    %v1235 = vadd.f32 %v1234, %v1203
    %v1236 = vadd.f32 %v1235, %v1204
    %v1237 = vadd.f32 %v1236, %v1205
    %v1238 = vadd.f32 %v1237, %v1206
    %1239 = vadd.xlane.f32.xlu0 %v1238
    %v1240 = vpop.xlane.xlu0 %1239
    %v1241 = vlaneseq
    %v1242 = vshrl.u32 %v1241, 7
    %v1243 = vsub.s32 5, %v1242
    %v1244 = vrot.slane %v1095, %v1243
    %v1245 = vlaneseq
    %v1246 = vshrl.u32 %v1245, 7
    %v1247 = vsub.s32 5, %v1246
    %v1248 = vrot.slane %v1096, %v1247
    %v1249 = vlaneseq
    %v1250 = vshrl.u32 %v1249, 7
    %v1251 = vsub.s32 5, %v1250
    %v1252 = vrot.slane %v1097, %v1251
    %v1253 = vlaneseq
    %v1254 = vshrl.u32 %v1253, 7
    %v1255 = vsub.s32 5, %v1254
    %v1256 = vrot.slane %v1098, %v1255
    %v1257 = vlaneseq
    %v1258 = vshrl.u32 %v1257, 7
    %v1259 = vsub.s32 5, %v1258
    %v1260 = vrot.slane %v1099, %v1259
    %v1261 = vlaneseq
    %v1262 = vshrl.u32 %v1261, 7
    %v1263 = vsub.s32 5, %v1262
    %v1264 = vrot.slane %v1100, %v1263
    %v1265 = vlaneseq
    %v1266 = vshrl.u32 %v1265, 7
    %v1267 = vsub.s32 5, %v1266
    %v1268 = vrot.slane %v1101, %v1267
    %v1269 = vlaneseq
    %v1270 = vshrl.u32 %v1269, 7
    %v1271 = vsub.s32 5, %v1270
    %v1272 = vrot.slane %v1102, %v1271
    %v1273 = vlaneseq
    %v1274 = vshrl.u32 %v1273, 7
    %v1275 = vsub.s32 5, %v1274
    %v1276 = vrot.slane %v1103, %v1275
    %v1277 = vlaneseq
    %v1278 = vshrl.u32 %v1277, 7
    %v1279 = vsub.s32 5, %v1278
    %v1280 = vrot.slane %v1104, %v1279
    %v1281 = vlaneseq
    %v1282 = vshrl.u32 %v1281, 7
    %v1283 = vsub.s32 5, %v1282
    %v1284 = vrot.slane %v1105, %v1283
    %v1285 = vlaneseq
    %v1286 = vshrl.u32 %v1285, 7
    %v1287 = vsub.s32 5, %v1286
    %v1288 = vrot.slane %v1106, %v1287
    %v1289 = vlaneseq
    %v1290 = vshrl.u32 %v1289, 7
    %v1291 = vsub.s32 5, %v1290
    %v1292 = vrot.slane %v1107, %v1291
    %v1293 = vlaneseq
    %v1294 = vshrl.u32 %v1293, 7
    %v1295 = vsub.s32 5, %v1294
    %v1296 = vrot.slane %v1108, %v1295
    %v1297 = vlaneseq
    %v1298 = vshrl.u32 %v1297, 7
    %v1299 = vsub.s32 5, %v1298
    %v1300 = vrot.slane %v1109, %v1299
    %v1301 = vlaneseq
    %v1302 = vshrl.u32 %v1301, 7
    %v1303 = vsub.s32 5, %v1302
    %v1304 = vrot.slane %v1110, %v1303
    %v1305 = vmul.f32 %v1055, %v1244
    %v1306 = vmul.f32 %v1056, %v1248
    %v1307 = vmul.f32 %v1057, %v1252
    %v1308 = vmul.f32 %v1058, %v1256
    %v1309 = vmul.f32 %v1059, %v1260
    %v1310 = vmul.f32 %v1060, %v1264
    %v1311 = vmul.f32 %v1061, %v1268
    %v1312 = vmul.f32 %v1062, %v1272
    %v1313 = vmul.f32 %v1063, %v1276
    %v1314 = vmul.f32 %v1064, %v1280
    %v1315 = vmul.f32 %v1065, %v1284
    %v1316 = vmul.f32 %v1066, %v1288
    %v1317 = vmul.f32 %v1067, %v1292
    %v1318 = vmul.f32 %v1068, %v1296
    %v1319 = vmul.f32 %v1069, %v1300
    %v1320 = vmul.f32 %v1070, %v1304
    %v1321 = vmul.f32 %v1071, %v1244
    %v1322 = vmul.f32 %v1072, %v1248
    %v1323 = vmul.f32 %v1073, %v1252
    %v1324 = vmul.f32 %v1074, %v1256
    %v1325 = vmul.f32 %v1075, %v1260
    %v1326 = vmul.f32 %v1076, %v1264
    %v1327 = vmul.f32 %v1077, %v1268
    %v1328 = vmul.f32 %v1078, %v1272
    %v1329 = vmul.f32 %v1079, %v1276
    %v1330 = vmul.f32 %v1080, %v1280
    %v1331 = vmul.f32 %v1081, %v1284
    %v1332 = vmul.f32 %v1082, %v1288
    %v1333 = vmul.f32 %v1083, %v1292
    %v1334 = vmul.f32 %v1084, %v1296
    %v1335 = vmul.f32 %v1085, %v1300
    %v1336 = vmul.f32 %v1086, %v1304
    %v1337 = vadd.f32 %v1305, %v1306
    %v1338 = vadd.f32 %v1337, %v1307
    %v1339 = vadd.f32 %v1338, %v1308
    %v1340 = vadd.f32 %v1339, %v1309
    %v1341 = vadd.f32 %v1340, %v1310
    %v1342 = vadd.f32 %v1341, %v1311
    %v1343 = vadd.f32 %v1342, %v1312
    %v1344 = vadd.f32 %v1343, %v1313
    %v1345 = vadd.f32 %v1344, %v1314
    %v1346 = vadd.f32 %v1345, %v1315
    %v1347 = vadd.f32 %v1346, %v1316
    %v1348 = vadd.f32 %v1347, %v1317
    %v1349 = vadd.f32 %v1348, %v1318
    %v1350 = vadd.f32 %v1349, %v1319
    %v1351 = vadd.f32 %v1350, %v1320
    %1352 = vadd.xlane.f32.xlu0 %v1351
    %v1353 = vpop.xlane.xlu0 %1352
    %v1354 = vadd.f32 %v1321, %v1322
    %v1355 = vadd.f32 %v1354, %v1323
    %v1356 = vadd.f32 %v1355, %v1324
    %v1357 = vadd.f32 %v1356, %v1325
    %v1358 = vadd.f32 %v1357, %v1326
    %v1359 = vadd.f32 %v1358, %v1327
    %v1360 = vadd.f32 %v1359, %v1328
    %v1361 = vadd.f32 %v1360, %v1329
    %v1362 = vadd.f32 %v1361, %v1330
    %v1363 = vadd.f32 %v1362, %v1331
    %v1364 = vadd.f32 %v1363, %v1332
    %v1365 = vadd.f32 %v1364, %v1333
    %v1366 = vadd.f32 %v1365, %v1334
    %v1367 = vadd.f32 %v1366, %v1335
    %v1368 = vadd.f32 %v1367, %v1336
    %1369 = vadd.xlane.f32.xlu0 %v1368
    %v1370 = vpop.xlane.xlu0 %1369
    %v1371 = vlaneseq
    %v1372 = vshrl.u32 %v1371, 7
    %v1373 = vsub.s32 6, %v1372
    %v1374 = vrot.slane %v1095, %v1373
    %v1375 = vlaneseq
    %v1376 = vshrl.u32 %v1375, 7
    %v1377 = vsub.s32 6, %v1376
    %v1378 = vrot.slane %v1096, %v1377
    %v1379 = vlaneseq
    %v1380 = vshrl.u32 %v1379, 7
    %v1381 = vsub.s32 6, %v1380
    %v1382 = vrot.slane %v1097, %v1381
    %v1383 = vlaneseq
    %v1384 = vshrl.u32 %v1383, 7
    %v1385 = vsub.s32 6, %v1384
    %v1386 = vrot.slane %v1098, %v1385
    %v1387 = vlaneseq
    %v1388 = vshrl.u32 %v1387, 7
    %v1389 = vsub.s32 6, %v1388
    %v1390 = vrot.slane %v1099, %v1389
    %v1391 = vlaneseq
    %v1392 = vshrl.u32 %v1391, 7
    %v1393 = vsub.s32 6, %v1392
    %v1394 = vrot.slane %v1100, %v1393
    %v1395 = vlaneseq
    %v1396 = vshrl.u32 %v1395, 7
    %v1397 = vsub.s32 6, %v1396
    %v1398 = vrot.slane %v1101, %v1397
    %v1399 = vlaneseq
    %v1400 = vshrl.u32 %v1399, 7
    %v1401 = vsub.s32 6, %v1400
    %v1402 = vrot.slane %v1102, %v1401
    %v1403 = vlaneseq
    %v1404 = vshrl.u32 %v1403, 7
    %v1405 = vsub.s32 6, %v1404
    %v1406 = vrot.slane %v1103, %v1405
    %v1407 = vlaneseq
    %v1408 = vshrl.u32 %v1407, 7
    %v1409 = vsub.s32 6, %v1408
    %v1410 = vrot.slane %v1104, %v1409
    %v1411 = vlaneseq
    %v1412 = vshrl.u32 %v1411, 7
    %v1413 = vsub.s32 6, %v1412
    %v1414 = vrot.slane %v1105, %v1413
    %v1415 = vlaneseq
    %v1416 = vshrl.u32 %v1415, 7
    %v1417 = vsub.s32 6, %v1416
    %v1418 = vrot.slane %v1106, %v1417
    %v1419 = vlaneseq
    %v1420 = vshrl.u32 %v1419, 7
    %v1421 = vsub.s32 6, %v1420
    %v1422 = vrot.slane %v1107, %v1421
    %v1423 = vlaneseq
    %v1424 = vshrl.u32 %v1423, 7
    %v1425 = vsub.s32 6, %v1424
    %v1426 = vrot.slane %v1108, %v1425
    %v1427 = vlaneseq
    %v1428 = vshrl.u32 %v1427, 7
    %v1429 = vsub.s32 6, %v1428
    %v1430 = vrot.slane %v1109, %v1429
    %v1431 = vlaneseq
    %v1432 = vshrl.u32 %v1431, 7
    %v1433 = vsub.s32 6, %v1432
    %v1434 = vrot.slane %v1110, %v1433
    %v1435 = vmul.f32 %v1055, %v1374
    %v1436 = vmul.f32 %v1056, %v1378
    %v1437 = vmul.f32 %v1057, %v1382
    %v1438 = vmul.f32 %v1058, %v1386
    %v1439 = vmul.f32 %v1059, %v1390
    %v1440 = vmul.f32 %v1060, %v1394
    %v1441 = vmul.f32 %v1061, %v1398
    %v1442 = vmul.f32 %v1062, %v1402
    %v1443 = vmul.f32 %v1063, %v1406
    %v1444 = vmul.f32 %v1064, %v1410
    %v1445 = vmul.f32 %v1065, %v1414
    %v1446 = vmul.f32 %v1066, %v1418
    %v1447 = vmul.f32 %v1067, %v1422
    %v1448 = vmul.f32 %v1068, %v1426
    %v1449 = vmul.f32 %v1069, %v1430
    %v1450 = vmul.f32 %v1070, %v1434
    %v1451 = vmul.f32 %v1071, %v1374
    %v1452 = vmul.f32 %v1072, %v1378
    %v1453 = vmul.f32 %v1073, %v1382
    %v1454 = vmul.f32 %v1074, %v1386
    %v1455 = vmul.f32 %v1075, %v1390
    %v1456 = vmul.f32 %v1076, %v1394
    %v1457 = vmul.f32 %v1077, %v1398
    %v1458 = vmul.f32 %v1078, %v1402
    %v1459 = vmul.f32 %v1079, %v1406
    %v1460 = vmul.f32 %v1080, %v1410
    %v1461 = vmul.f32 %v1081, %v1414
    %v1462 = vmul.f32 %v1082, %v1418
    %v1463 = vmul.f32 %v1083, %v1422
    %v1464 = vmul.f32 %v1084, %v1426
    %v1465 = vmul.f32 %v1085, %v1430
    %v1466 = vmul.f32 %v1086, %v1434
    %v1467 = vadd.f32 %v1435, %v1436
    %v1468 = vadd.f32 %v1467, %v1437
    %v1469 = vadd.f32 %v1468, %v1438
    %v1470 = vadd.f32 %v1469, %v1439
    %v1471 = vadd.f32 %v1470, %v1440
    %v1472 = vadd.f32 %v1471, %v1441
    %v1473 = vadd.f32 %v1472, %v1442
    %v1474 = vadd.f32 %v1473, %v1443
    %v1475 = vadd.f32 %v1474, %v1444
    %v1476 = vadd.f32 %v1475, %v1445
    %v1477 = vadd.f32 %v1476, %v1446
    %v1478 = vadd.f32 %v1477, %v1447
    %v1479 = vadd.f32 %v1478, %v1448
    %v1480 = vadd.f32 %v1479, %v1449
    %v1481 = vadd.f32 %v1480, %v1450
    %1482 = vadd.xlane.f32.xlu0 %v1481
    %v1483 = vpop.xlane.xlu0 %1482
    %v1484 = vadd.f32 %v1451, %v1452
    %v1485 = vadd.f32 %v1484, %v1453
    %v1486 = vadd.f32 %v1485, %v1454
    %v1487 = vadd.f32 %v1486, %v1455
    %v1488 = vadd.f32 %v1487, %v1456
    %v1489 = vadd.f32 %v1488, %v1457
    %v1490 = vadd.f32 %v1489, %v1458
    %v1491 = vadd.f32 %v1490, %v1459
    %v1492 = vadd.f32 %v1491, %v1460
    %v1493 = vadd.f32 %v1492, %v1461
    %v1494 = vadd.f32 %v1493, %v1462
    %v1495 = vadd.f32 %v1494, %v1463
    %v1496 = vadd.f32 %v1495, %v1464
    %v1497 = vadd.f32 %v1496, %v1465
    %v1498 = vadd.f32 %v1497, %v1466
    %1499 = vadd.xlane.f32.xlu0 %v1498
    %v1500 = vpop.xlane.xlu0 %1499
    %v1501 = vlaneseq
    %v1502 = vshrl.u32 %v1501, 7
    %v1503 = vsub.s32 7, %v1502
    %v1504 = vrot.slane %v1095, %v1503
    %v1505 = vlaneseq
    %v1506 = vshrl.u32 %v1505, 7
    %v1507 = vsub.s32 7, %v1506
    %v1508 = vrot.slane %v1096, %v1507
    %v1509 = vlaneseq
    %v1510 = vshrl.u32 %v1509, 7
    %v1511 = vsub.s32 7, %v1510
    %v1512 = vrot.slane %v1097, %v1511
    %v1513 = vlaneseq
    %v1514 = vshrl.u32 %v1513, 7
    %v1515 = vsub.s32 7, %v1514
    %v1516 = vrot.slane %v1098, %v1515
    %v1517 = vlaneseq
    %v1518 = vshrl.u32 %v1517, 7
    %v1519 = vsub.s32 7, %v1518
    %v1520 = vrot.slane %v1099, %v1519
    %v1521 = vlaneseq
    %v1522 = vshrl.u32 %v1521, 7
    %v1523 = vsub.s32 7, %v1522
    %v1524 = vrot.slane %v1100, %v1523
    %v1525 = vlaneseq
    %v1526 = vshrl.u32 %v1525, 7
    %v1527 = vsub.s32 7, %v1526
    %v1528 = vrot.slane %v1101, %v1527
    %v1529 = vlaneseq
    %v1530 = vshrl.u32 %v1529, 7
    %v1531 = vsub.s32 7, %v1530
    %v1532 = vrot.slane %v1102, %v1531
    %v1533 = vlaneseq
    %v1534 = vshrl.u32 %v1533, 7
    %v1535 = vsub.s32 7, %v1534
    %v1536 = vrot.slane %v1103, %v1535
    %v1537 = vlaneseq
    %v1538 = vshrl.u32 %v1537, 7
    %v1539 = vsub.s32 7, %v1538
    %v1540 = vrot.slane %v1104, %v1539
    %v1541 = vlaneseq
    %v1542 = vshrl.u32 %v1541, 7
    %v1543 = vsub.s32 7, %v1542
    %v1544 = vrot.slane %v1105, %v1543
    %v1545 = vlaneseq
    %v1546 = vshrl.u32 %v1545, 7
    %v1547 = vsub.s32 7, %v1546
    %v1548 = vrot.slane %v1106, %v1547
    %v1549 = vlaneseq
    %v1550 = vshrl.u32 %v1549, 7
    %v1551 = vsub.s32 7, %v1550
    %v1552 = vrot.slane %v1107, %v1551
    %v1553 = vlaneseq
    %v1554 = vshrl.u32 %v1553, 7
    %v1555 = vsub.s32 7, %v1554
    %v1556 = vrot.slane %v1108, %v1555
    %v1557 = vlaneseq
    %v1558 = vshrl.u32 %v1557, 7
    %v1559 = vsub.s32 7, %v1558
    %v1560 = vrot.slane %v1109, %v1559
    %v1561 = vlaneseq
    %v1562 = vshrl.u32 %v1561, 7
    %v1563 = vsub.s32 7, %v1562
    %v1564 = vrot.slane %v1110, %v1563
    %v1565 = vmul.f32 %v1055, %v1504
    %v1566 = vmul.f32 %v1056, %v1508
    %v1567 = vmul.f32 %v1057, %v1512
    %v1568 = vmul.f32 %v1058, %v1516
    %v1569 = vmul.f32 %v1059, %v1520
    %v1570 = vmul.f32 %v1060, %v1524
    %v1571 = vmul.f32 %v1061, %v1528
    %v1572 = vmul.f32 %v1062, %v1532
    %v1573 = vmul.f32 %v1063, %v1536
    %v1574 = vmul.f32 %v1064, %v1540
    %v1575 = vmul.f32 %v1065, %v1544
    %v1576 = vmul.f32 %v1066, %v1548
    %v1577 = vmul.f32 %v1067, %v1552
    %v1578 = vmul.f32 %v1068, %v1556
    %v1579 = vmul.f32 %v1069, %v1560
    %v1580 = vmul.f32 %v1070, %v1564
    %v1581 = vmul.f32 %v1071, %v1504
    %v1582 = vmul.f32 %v1072, %v1508
    %v1583 = vmul.f32 %v1073, %v1512
    %v1584 = vmul.f32 %v1074, %v1516
    %v1585 = vmul.f32 %v1075, %v1520
    %v1586 = vmul.f32 %v1076, %v1524
    %v1587 = vmul.f32 %v1077, %v1528
    %v1588 = vmul.f32 %v1078, %v1532
    %v1589 = vmul.f32 %v1079, %v1536
    %v1590 = vmul.f32 %v1080, %v1540
    %v1591 = vmul.f32 %v1081, %v1544
    %v1592 = vmul.f32 %v1082, %v1548
    %v1593 = vmul.f32 %v1083, %v1552
    %v1594 = vmul.f32 %v1084, %v1556
    %v1595 = vmul.f32 %v1085, %v1560
    %v1596 = vmul.f32 %v1086, %v1564
    %v1597 = vadd.f32 %v1565, %v1566
    %v1598 = vadd.f32 %v1597, %v1567
    %v1599 = vadd.f32 %v1598, %v1568
    %v1600 = vadd.f32 %v1599, %v1569
    %v1601 = vadd.f32 %v1600, %v1570
    %v1602 = vadd.f32 %v1601, %v1571
    %v1603 = vadd.f32 %v1602, %v1572
    %v1604 = vadd.f32 %v1603, %v1573
    %v1605 = vadd.f32 %v1604, %v1574
    %v1606 = vadd.f32 %v1605, %v1575
    %v1607 = vadd.f32 %v1606, %v1576
    %v1608 = vadd.f32 %v1607, %v1577
    %v1609 = vadd.f32 %v1608, %v1578
    %v1610 = vadd.f32 %v1609, %v1579
    %v1611 = vadd.f32 %v1610, %v1580
    %1612 = vadd.xlane.f32.xlu0 %v1611
    %v1613 = vpop.xlane.xlu0 %1612
    %v1614 = vadd.f32 %v1581, %v1582
    %v1615 = vadd.f32 %v1614, %v1583
    %v1616 = vadd.f32 %v1615, %v1584
    %v1617 = vadd.f32 %v1616, %v1585
    %v1618 = vadd.f32 %v1617, %v1586
    %v1619 = vadd.f32 %v1618, %v1587
    %v1620 = vadd.f32 %v1619, %v1588
    %v1621 = vadd.f32 %v1620, %v1589
    %v1622 = vadd.f32 %v1621, %v1590
    %v1623 = vadd.f32 %v1622, %v1591
    %v1624 = vadd.f32 %v1623, %v1592
    %v1625 = vadd.f32 %v1624, %v1593
    %v1626 = vadd.f32 %v1625, %v1594
    %v1627 = vadd.f32 %v1626, %v1595
    %v1628 = vadd.f32 %v1627, %v1596
    %1629 = vadd.xlane.f32.xlu0 %v1628
    %v1630 = vpop.xlane.xlu0 %1629
    %v1631 = vsel %vm239, %v1223, %v1353
    %v1632 = vsel %vm239, %v1240, %v1370
    %v1633 = vsel %vm293, %v1631, %v1483
    %v1634 = vsel %vm293, %v1632, %v1500
    %vm1635 = vcmask 23552
    %v1636 = vsel %vm1635, %v1633, %v1613
    %v1637 = vsel %vm1635, %v1634, %v1630
    %v1638 = vlaneseq
    %v1639 = vshrl.u32 %v1638, 7
    %v1640 = vsub.s32 0, %v1639
    %v1641 = vrot.slane %v37, %v1640
    %v1642 = vadd.f32 %v1636, %v1641
    %v1643 = vadd.f32 %v1637, %v1641
    %v1644 = vadd.f32 %v520, %v1642
    %v1645 = vadd.f32 %v521, %v1643
    %v1646 = vsel %vm66, %v1644, 0.0
    %1647 = vadd.xlane.f32.xlu0 %v1646
    %v1648 = vpop.xlane.xlu0 %1647
    %v1649 = vsel %vm66, %v1645, 0.0
    %1650 = vadd.xlane.f32.xlu0 %v1649
    %v1651 = vpop.xlane.xlu0 %1650
    %v1652 = vmul.f32 %v1648, %v489
    %v1653 = vmul.f32 %v1651, %v489
    %v1654 = vsub.f32 %v1644, %v1652
    %v1655 = vsub.f32 %v1645, %v1653
    %v1656 = vmul.f32 %v1654, %v1654
    %v1657 = vmul.f32 %v1655, %v1655
    %v1658 = vsel %vm66, %v1656, 0.0
    %1659 = vadd.xlane.f32.xlu0 %v1658
    %v1660 = vpop.xlane.xlu0 %1659
    %v1661 = vsel %vm66, %v1657, 0.0
    %1662 = vadd.xlane.f32.xlu0 %v1661
    %v1663 = vpop.xlane.xlu0 %1662
    %v1664 = vmul.f32 %v1660, %v489
    %v1665 = vmul.f32 %v1663, %v489
    %v1666 = vadd.f32 %v1664, 1e-05
    %v1667 = vadd.f32 %v1665, 1e-05
    %v1668 = vrsqrt.pop %v1666
    %v1669 = vrsqrt.pop %v1667
    %v1670 = vmul.f32 %v1654, %v1668
    %v1671 = vmul.f32 %v1655, %v1669
    %v1672 = vlaneseq
    %v1673 = vshrl.u32 %v1672, 7
    %v1674 = vsub.s32 0, %v1673
    %v1675 = vrot.slane %v35, %v1674
    %v1676 = vmul.f32 %v1670, %v1675
    %v1677 = vmul.f32 %v1671, %v1675
    %v1678 = vlaneseq
    %v1679 = vshrl.u32 %v1678, 7
    %v1680 = vsub.s32 0, %v1679
    %v1681 = vrot.slane %v36, %v1680
    %v1682 = vadd.f32 %v1676, %v1681
    %v1683 = vadd.f32 %v1677, %v1681
    %v1684 = vlaneseq
    %v1685 = vshrl.u32 %v1684, 7
    %v1686 = vsub.s32 0, %v1685
    %v1687 = vrot.slane %v38, %v1686
    %v1688 = vmul.f32 %v1682, %v1687
    %v1689 = vmul.f32 %v1683, %v1687
    %v1690 = vsel %vm66, %v1688, 0.0
    %1691 = vadd.xlane.f32.xlu0 %v1690
    %v1692 = vpop.xlane.xlu0 %1691
    %v1693 = vsel %vm66, %v1689, 0.0
    %1694 = vadd.xlane.f32.xlu0 %v1693
    %v1695 = vpop.xlane.xlu0 %1694
    %v1696 = vlaneseq
    %v1697 = vshrl.u32 %v1696, 7
    %v1698 = vsub.s32 0, %v1697
    %v1699 = vrot.slane %v39, %v1698
    %v1700 = vadd.f32 %v1692, %v1699
    %v1701 = vadd.f32 %v1695, %v1699
    %1702 = vst.msk [vmem:[%s3] sm:$0xff] %vm239, %v1700
    %1703 = vst.msk [vmem:[%s3 + $0x8] sm:$0xff] %vm239, %v1701
    // Predicated region
    $region18: #{tpu_custom_call.1} parent=1 // pred_check
      _
    $region19: #{tpu_custom_call.1} parent=1 // pred_check_branch
      %1705 = sbr.rel (0) target = $region21
    $region20: #{tpu_custom_call.1} parent=1 // pred_region
      _
    $region21: #{tpu_custom_call.1} parent=1 // pred_fallthru
      _
    // Predicated region
    $region22: #{tpu_custom_call.1} parent=1 // pred_check
      _
    $region23: #{tpu_custom_call.1} parent=1 // pred_check_branch
      %1707 = sbr.rel (0) target = $region25
    $region24: #{tpu_custom_call.1} parent=1 // pred_region
      _
    $region25: #{tpu_custom_call.1} parent=1 // pred_fallthru
      _
    %1708 = vsyncpa [#allocation3], 1

</llo_original>
